<compile_context>
chip_gen: v6e
topology: v6e:2x2x1
jax: 0.10.0
libtpu: 0.0.40
codegen_flags: <defaults>
</compile_context>

<pallas_src>
import math
import functools

import jax
import jax.numpy as jnp
from jax import lax
from jax.experimental import pallas as pl
from jax.experimental.pallas import tpu as pltpu


def _cross_attn_kernel(x_ref, y_ref, bias_ref,
                       wq_ref, bq_ref,
                       wkv_ref, bkv_ref,
                       wo_ref, bo_ref,
                       out_ref,
                       ctx_ref,
                       *, num_head, dim_per_head, hidden, approx_recip):
    x = x_ref[0]        # (Tx, C)   f32 or bf16 (MXU input dtype)
    y = y_ref[0]        # (Ty, C)
    bias = bias_ref[0]  # (Tx, Ty)  f32 additive mask bias: 0 (keep) / -1e30 (masked)

    cdt = x.dtype       # MXU input dtype; accumulation is always f32

    # Projections.  1/sqrt(D) already folded into wq/bq by the wrapper; K and V are
    # fused into one (C, 2*hidden) matmul.
    q = jnp.dot(x, wq_ref[...], preferred_element_type=jnp.float32) + bq_ref[...]
    kv = jnp.dot(y, wkv_ref[...], preferred_element_type=jnp.float32) + bkv_ref[...]

    for h in range(num_head):                      # static unroll over heads
        sl_q = slice(h * dim_per_head, (h + 1) * dim_per_head)
        sl_v = slice(hidden + h * dim_per_head, hidden + (h + 1) * dim_per_head)
        qh = q[:, sl_q].astype(cdt)                # (Tx, D)  (scale pre-applied)
        kh = kv[:, sl_q].astype(cdt)               # (Ty, D)
        vh = kv[:, sl_v].astype(cdt)               # (Ty, D)

        # score[tx, ty] = <q[tx], k[ty]> — NT form, no XLU transposes.
        s = lax.dot_general(qh, kh, (((1,), (1,)), ((), ())),
                            preferred_element_type=jnp.float32)   # (Tx, Ty)
        s = s + bias                                # additive mask (no select)

        # masked softmax over the key axis (lane axis); divide goes to the EUP.
        m = jnp.max(s, axis=-1, keepdims=True)
        e = jnp.exp(s - m)
        denom = jnp.sum(e, axis=-1, keepdims=True)
        p = e * pl.reciprocal(denom, approx=approx_recip)          # (Tx, Ty)

        # weighted sum over keys -> write directly into the scratch slice
        ctx_ref[:, sl_q] = jnp.dot(p.astype(cdt), vh,
                                   preferred_element_type=jnp.float32)

    # Single big output projection over the concatenated heads.
    out = jnp.dot(ctx_ref[...].astype(cdt), wo_ref[...],
                  preferred_element_type=jnp.float32) + bo_ref[...]
    out_ref[0] = out.astype(out_ref.dtype)


def cross_attention_pallas(x, y, mask, params, num_head, mask_value=0,
                           compute_dtype=None, approx_reciprocal=True):
    """Cross attention: q from x [N,Tx,C], k/v from y [N,Ty,C], mask [N,Ty,Tx]."""
    N, Tx, C = x.shape
    Ny, Ty, Cy = y.shape
    assert Ny == N and Cy == C
    hidden = params["wq"].shape[1]
    assert hidden % num_head == 0
    D = hidden // num_head
    scale = 1.0 / math.sqrt(D)

    cdt = jnp.dtype(compute_dtype) if compute_dtype is not None else x.dtype

    # ---- one-time wrapper-side prep (outside the kernel hot path) ------------
    # Fold the softmax scale into the query projection.
    wq = (params["wq"] * scale).astype(cdt)
    bq = (params["bq"] * scale).astype(jnp.float32)
    # Fuse K and V projections into one matmul.
    wkv = jnp.concatenate([params["wk"], params["wv"]], axis=1).astype(cdt)
    bkv = jnp.concatenate([params["bk"], params["bv"]], axis=1).astype(jnp.float32)
    wo = params["wo"].astype(cdt)
    bo = params["bo"].astype(jnp.float32)
    # Mask [N,Ty,Tx] -> additive bias [N,Tx,Ty]; masking/softmax stay in f32 so the
    # -1e30 sentinel never passes through a reduced-precision cast.
    bias = jnp.where(mask == mask_value, jnp.float32(-1e30), jnp.float32(0.0))
    bias = jnp.swapaxes(bias, 1, 2)    # (N, Tx, Ty)

    xc = x.astype(cdt)
    yc = y.astype(cdt)

    kernel = functools.partial(
        _cross_attn_kernel,
        num_head=num_head, dim_per_head=D, hidden=hidden,
        approx_recip=approx_reciprocal)

    def const_spec(shape):
        # Constant block index -> fetched once, never re-DMAed across grid steps.
        return pl.BlockSpec(shape, lambda n: (0, 0))

    in_specs = [
        pl.BlockSpec((1, Tx, C), lambda n: (n, 0, 0)),     # x
        pl.BlockSpec((1, Ty, C), lambda n: (n, 0, 0)),     # y
        pl.BlockSpec((1, Tx, Ty), lambda n: (n, 0, 0)),    # additive mask bias
        const_spec((C, hidden)),        # wq (pre-scaled)
        const_spec((1, hidden)),        # bq (pre-scaled)
        const_spec((C, 2 * hidden)),    # wkv
        const_spec((1, 2 * hidden)),    # bkv
        const_spec((hidden, C)),        # wo
        const_spec((1, C)),             # bo
    ]
    out_spec = pl.BlockSpec((1, Tx, C), lambda n: (n, 0, 0))

    # Advisory cost estimate (per full call) for the XLA scheduler.
    itemsize = jnp.dtype(cdt).itemsize
    flops = N * (2 * Tx * C * hidden              # q proj
                 + 2 * Ty * C * (2 * hidden)      # fused kv proj
                 + 2 * Tx * Ty * hidden           # scores (all heads)
                 + 2 * Tx * Ty * hidden           # weighted sum (all heads)
                 + 2 * Tx * hidden * C)           # out proj
    bytes_accessed = (N * (Tx * C + Ty * C + Tx * C) * itemsize
                      + N * Tx * Ty * 4
                      + (C * hidden + C * 2 * hidden + hidden * C) * itemsize
                      + (hidden + 2 * hidden + C) * 4)
    cost = pl.CostEstimate(flops=flops,
                           transcendentals=N * num_head * Tx * Ty,
                           bytes_accessed=bytes_accessed)

    return pl.pallas_call(
        kernel,
        out_shape=jax.ShapeDtypeStruct((N, Tx, C), x.dtype),
        grid_spec=pltpu.PrefetchScalarGridSpec(
            num_scalar_prefetch=0,
            grid=(N,),
            in_specs=in_specs,
            out_specs=out_spec,
            scratch_shapes=[pltpu.VMEM((Tx, hidden), jnp.float32)]),
        compiler_params=pltpu.CompilerParams(
            dimension_semantics=("parallel",),          # shards batch over TCs
            vmem_limit_bytes=32 * 1024 * 1024),
        cost_estimate=cost,
    )(xc, yc, bias, wq, bq, wkv, bkv, wo, bo)


def cross_attention_ref(x, y, mask, params, num_head, mask_value=0):
    """Pure-JAX reference for correctness checking."""
    N, Tx, C = x.shape
    Ty = y.shape[1]
    hidden = params["wq"].shape[1]
    D = hidden // num_head

    q = x @ params["wq"] + params["bq"]
    k = y @ params["wk"] + params["bk"]
    v = y @ params["wv"] + params["bv"]

    qh = q.reshape(N, Tx, num_head, D)
    kh = k.reshape(N, Ty, num_head, D)
    vh = v.reshape(N, Ty, num_head, D)

    s = jnp.einsum("nyhd,nxhd->nhyx", kh, qh) / math.sqrt(D)
    s = jnp.where(mask[:, None] == mask_value, -1e30, s)
    w = jax.nn.softmax(s, axis=2)                      # softmax over Ty (keys)
    ctx = jnp.einsum("nhyx,nyhd->nxhd", w, vh).reshape(N, Tx, hidden)
    return ctx @ params["wo"] + params["bo"]


def init_params(key, input_size, hidden_size):
    """Deterministic init mimicking nn.Linear default (uniform +/- 1/sqrt(fan_in))."""
    ks = jax.random.split(key, 8)
    lim_qkv = 1.0 / math.sqrt(input_size)
    lim_out = 1.0 / math.sqrt(hidden_size)
    u = lambda k, shape, lim: jax.random.uniform(k, shape, jnp.float32, -lim, lim)
    return {
        "wq": u(ks[0], (input_size, hidden_size), lim_qkv),
        "wk": u(ks[1], (input_size, hidden_size), lim_qkv),
        "wv": u(ks[2], (input_size, hidden_size), lim_qkv),
        "bq": u(ks[3], (1, hidden_size), lim_qkv),
        "bk": u(ks[4], (1, hidden_size), lim_qkv),
        "bv": u(ks[5], (1, hidden_size), lim_qkv),
        "wo": u(ks[6], (hidden_size, input_size), lim_out),
        "bo": u(ks[7], (1, input_size), lim_out),
    }


if __name__ == "__main__":
    # Small shapes consistent with the module: batch N, query seq Tx, key seq Ty,
    # channel C=input_size, hidden_size, num_head.
    N, Tx, Ty, C, hidden, num_head = 2, 8, 12, 16, 32, 4

    key = jax.random.PRNGKey(0)
    kx, ky, kp = jax.random.split(key, 3)

    x = jax.random.normal(kx, (N, Tx, C), jnp.float32)
    y = jax.random.normal(ky, (N, Ty, C), jnp.float32)

    # Mask: [N, Ty, Tx], value 0 means "attention weight must be zero".
    mask = jnp.ones((N, Ty, Tx), jnp.float32)
    mask = mask.at[1, Ty - 3:, :].set(0.0)   # mask out last 3 keys for batch 1

    params = init_params(kp, C, hidden)
    ref = cross_attention_ref(x, y, mask, params, num_head)

    # 1) Strict f32 validation (exact softmax normalize).
    out = cross_attention_pallas(x, y, mask, params, num_head,
                                 approx_reciprocal=False)
    out = jax.block_until_ready(out)
    assert out.shape == (N, Tx, C)
    assert jnp.allclose(out, ref, atol=1e-5, rtol=1e-5), "f32 mismatch vs reference"

    # 2) Performance configuration: bf16 MXU inputs (v6e/v7x) + EUP approx reciprocal.
    out_fast = cross_attention_pallas(x, y, mask, params, num_head,
                                      compute_dtype=jnp.bfloat16,
                                      approx_reciprocal=True)
    out_fast = jax.block_until_ready(out_fast)
    assert out_fast.shape == (N, Tx, C)
    assert jnp.allclose(out_fast, ref, atol=1e-1, rtol=1e-1), "bf16 mismatch vs reference"

    print("KERNEL_OK")
</pallas_src>

<mosaic_0001>
module attributes {stable_mosaic.version = 11 : i64} {
  func.func @_cross_attn_kernel(%arg0: i32, %arg1: memref<1x8x16xf32, #tpu.memory_space<vmem>>, %arg2: memref<1x12x16xf32, #tpu.memory_space<vmem>>, %arg3: memref<1x8x12xf32, #tpu.memory_space<vmem>>, %arg4: memref<16x32xf32, #tpu.memory_space<vmem>>, %arg5: memref<1x32xf32, #tpu.memory_space<vmem>>, %arg6: memref<16x64xf32, #tpu.memory_space<vmem>>, %arg7: memref<1x64xf32, #tpu.memory_space<vmem>>, %arg8: memref<32x16xf32, #tpu.memory_space<vmem>>, %arg9: memref<1x16xf32, #tpu.memory_space<vmem>>, %arg10: memref<1x8x16xf32, #tpu.memory_space<vmem>>, %arg11: memref<8x32xf32, #tpu.memory_space<vmem>>) attributes {dimension_semantics = [#tpu.dimension_semantics<parallel>], iteration_bounds = array<i64: 2>, scalar_prefetch = 0 : i64, scratch_operands = 1 : i64, tpu.core_type = #tpu.core_type<tc>, window_params = [{transform_indices = @transform_0, window_bounds = array<i64: 1, 8, 16>}, {transform_indices = @transform_1, window_bounds = array<i64: 1, 12, 16>}, {transform_indices = @transform_2, window_bounds = array<i64: 1, 8, 12>}, {pipeline_mode = #tpu.pipeline_mode<synchronous>, transform_indices = @transform_3, window_bounds = array<i64: 16, 32>}, {pipeline_mode = #tpu.pipeline_mode<synchronous>, transform_indices = @transform_4, window_bounds = array<i64: 1, 32>}, {pipeline_mode = #tpu.pipeline_mode<synchronous>, transform_indices = @transform_5, window_bounds = array<i64: 16, 64>}, {pipeline_mode = #tpu.pipeline_mode<synchronous>, transform_indices = @transform_6, window_bounds = array<i64: 1, 64>}, {pipeline_mode = #tpu.pipeline_mode<synchronous>, transform_indices = @transform_7, window_bounds = array<i64: 32, 16>}, {pipeline_mode = #tpu.pipeline_mode<synchronous>, transform_indices = @transform_8, window_bounds = array<i64: 1, 16>}, {transform_indices = @transform_9, window_bounds = array<i64: 1, 8, 16>}]} {
    %c0 = arith.constant 0 : index
    %c0_0 = arith.constant 0 : index
    %c0_1 = arith.constant 0 : index
    %0 = vector.load %arg1[%c0, %c0_0, %c0_1] : memref<1x8x16xf32, #tpu.memory_space<vmem>>, vector<1x8x16xf32>
    %1 = vector.shape_cast %0 : vector<1x8x16xf32> to vector<8x16xf32>
    %c0_2 = arith.constant 0 : index
    %c0_3 = arith.constant 0 : index
    %c0_4 = arith.constant 0 : index
    %2 = vector.load %arg2[%c0_2, %c0_3, %c0_4] : memref<1x12x16xf32, #tpu.memory_space<vmem>>, vector<1x12x16xf32>
    %3 = vector.shape_cast %2 : vector<1x12x16xf32> to vector<12x16xf32>
    %c0_5 = arith.constant 0 : index
    %c0_6 = arith.constant 0 : index
    %c0_7 = arith.constant 0 : index
    %4 = vector.load %arg3[%c0_5, %c0_6, %c0_7] : memref<1x8x12xf32, #tpu.memory_space<vmem>>, vector<1x8x12xf32>
    %5 = vector.shape_cast %4 : vector<1x8x12xf32> to vector<8x12xf32>
    %c0_8 = arith.constant 0 : index
    %c0_9 = arith.constant 0 : index
    %6 = vector.load %arg4[%c0_8, %c0_9] : memref<16x32xf32, #tpu.memory_space<vmem>>, vector<16x32xf32>
    %cst = arith.constant dense<0.000000e+00> : vector<8x32xf32>
    %7 = tpu.matmul %1, %6, %cst {dimension_numbers = #tpu.dot_dimension_numbers<[1], [0], [0], [1], [0, 0, 1, 1], [], []>} : vector<8x16xf32>, vector<16x32xf32>, vector<8x32xf32> -> vector<8x32xf32>
    %c0_10 = arith.constant 0 : index
    %c0_11 = arith.constant 0 : index
    %8 = vector.load %arg5[%c0_10, %c0_11] : memref<1x32xf32, #tpu.memory_space<vmem>>, vector<1x32xf32>
    %9 = vector.broadcast %8 : vector<1x32xf32> to vector<8x32xf32>
    %10 = arith.addf %7, %9 : vector<8x32xf32>
    %c0_12 = arith.constant 0 : index
    %c0_13 = arith.constant 0 : index
    %11 = vector.load %arg6[%c0_12, %c0_13] : memref<16x64xf32, #tpu.memory_space<vmem>>, vector<16x64xf32>
    %cst_14 = arith.constant dense<0.000000e+00> : vector<12x64xf32>
    %12 = tpu.matmul %3, %11, %cst_14 {dimension_numbers = #tpu.dot_dimension_numbers<[1], [0], [0], [1], [0, 0, 1, 1], [], []>} : vector<12x16xf32>, vector<16x64xf32>, vector<12x64xf32> -> vector<12x64xf32>
    %c0_15 = arith.constant 0 : index
    %c0_16 = arith.constant 0 : index
    %13 = vector.load %arg7[%c0_15, %c0_16] : memref<1x64xf32, #tpu.memory_space<vmem>>, vector<1x64xf32>
    %14 = vector.broadcast %13 : vector<1x64xf32> to vector<12x64xf32>
    %15 = arith.addf %12, %14 : vector<12x64xf32>
    %16 = vector.extract_strided_slice %10 {offsets = [0, 0], sizes = [8, 8], strides = [1, 1]} : vector<8x32xf32> to vector<8x8xf32>
    %17 = vector.extract_strided_slice %15 {offsets = [0, 0], sizes = [12, 8], strides = [1, 1]} : vector<12x64xf32> to vector<12x8xf32>
    %18 = vector.extract_strided_slice %15 {offsets = [0, 32], sizes = [12, 8], strides = [1, 1]} : vector<12x64xf32> to vector<12x8xf32>
    %cst_17 = arith.constant dense<0.000000e+00> : vector<8x12xf32>
    %19 = tpu.matmul %16, %17, %cst_17 {dimension_numbers = #tpu.dot_dimension_numbers<[1], [1], [0], [0], [0, 0, 1, 0], [], []>} : vector<8x8xf32>, vector<12x8xf32>, vector<8x12xf32> -> vector<8x12xf32>
    %20 = arith.addf %19, %5 : vector<8x12xf32>
    %cst_18 = arith.constant dense<0xFF800000> : vector<8xf32>
    %21 = vector.multi_reduction <maximumf>, %20, %cst_18 [1] : vector<8x12xf32> to vector<8xf32>
    %22 = vector.shape_cast %21 : vector<8xf32> to vector<8x1xf32>
    %23 = vector.broadcast %22 : vector<8x1xf32> to vector<8x12xf32>
    %24 = arith.subf %20, %23 : vector<8x12xf32>
    %25 = math.exp %24 : vector<8x12xf32>
    %cst_19 = arith.constant dense<0.000000e+00> : vector<8xf32>
    %26 = vector.multi_reduction <add>, %25, %cst_19 [1] : vector<8x12xf32> to vector<8xf32>
    %27 = vector.shape_cast %26 : vector<8xf32> to vector<8x1xf32>
    %28 = tpu.reciprocal %27 : vector<8x1xf32> -> vector<8x1xf32>
    %29 = vector.broadcast %28 : vector<8x1xf32> to vector<8x12xf32>
    %30 = arith.mulf %25, %29 : vector<8x12xf32>
    %cst_20 = arith.constant dense<0.000000e+00> : vector<8x8xf32>
    %31 = tpu.matmul %30, %18, %cst_20 {dimension_numbers = #tpu.dot_dimension_numbers<[1], [0], [0], [1], [0, 0, 1, 1], [], []>} : vector<8x12xf32>, vector<12x8xf32>, vector<8x8xf32> -> vector<8x8xf32>
    %c0_21 = arith.constant 0 : index
    %c0_22 = arith.constant 0 : index
    %32 = vector.load %arg11[%c0_21, %c0_22] : memref<8x32xf32, #tpu.memory_space<vmem>>, vector<8x8xf32>
    tpu.vector_store %arg11[%c0_21, %c0_22], %31 {strides = array<i32>} : memref<8x32xf32, #tpu.memory_space<vmem>>, vector<8x8xf32>,
    %33 = vector.extract_strided_slice %10 {offsets = [0, 8], sizes = [8, 8], strides = [1, 1]} : vector<8x32xf32> to vector<8x8xf32>
    %34 = vector.extract_strided_slice %15 {offsets = [0, 8], sizes = [12, 8], strides = [1, 1]} : vector<12x64xf32> to vector<12x8xf32>
    %35 = vector.extract_strided_slice %15 {offsets = [0, 40], sizes = [12, 8], strides = [1, 1]} : vector<12x64xf32> to vector<12x8xf32>
    %cst_23 = arith.constant dense<0.000000e+00> : vector<8x12xf32>
    %36 = tpu.matmul %33, %34, %cst_23 {dimension_numbers = #tpu.dot_dimension_numbers<[1], [1], [0], [0], [0, 0, 1, 0], [], []>} : vector<8x8xf32>, vector<12x8xf32>, vector<8x12xf32> -> vector<8x12xf32>
    %37 = arith.addf %36, %5 : vector<8x12xf32>
    %cst_24 = arith.constant dense<0xFF800000> : vector<8xf32>
    %38 = vector.multi_reduction <maximumf>, %37, %cst_24 [1] : vector<8x12xf32> to vector<8xf32>
    %39 = vector.shape_cast %38 : vector<8xf32> to vector<8x1xf32>
    %40 = vector.broadcast %39 : vector<8x1xf32> to vector<8x12xf32>
    %41 = arith.subf %37, %40 : vector<8x12xf32>
    %42 = math.exp %41 : vector<8x12xf32>
    %cst_25 = arith.constant dense<0.000000e+00> : vector<8xf32>
    %43 = vector.multi_reduction <add>, %42, %cst_25 [1] : vector<8x12xf32> to vector<8xf32>
    %44 = vector.shape_cast %43 : vector<8xf32> to vector<8x1xf32>
    %45 = tpu.reciprocal %44 : vector<8x1xf32> -> vector<8x1xf32>
    %46 = vector.broadcast %45 : vector<8x1xf32> to vector<8x12xf32>
    %47 = arith.mulf %42, %46 : vector<8x12xf32>
    %cst_26 = arith.constant dense<0.000000e+00> : vector<8x8xf32>
    %48 = tpu.matmul %47, %35, %cst_26 {dimension_numbers = #tpu.dot_dimension_numbers<[1], [0], [0], [1], [0, 0, 1, 1], [], []>} : vector<8x12xf32>, vector<12x8xf32>, vector<8x8xf32> -> vector<8x8xf32>
    %c0_27 = arith.constant 0 : index
    %c8 = arith.constant 8 : index
    %49 = vector.load %arg11[%c0_27, %c8] : memref<8x32xf32, #tpu.memory_space<vmem>>, vector<8x8xf32>
    tpu.vector_store %arg11[%c0_27, %c8], %48 {strides = array<i32>} : memref<8x32xf32, #tpu.memory_space<vmem>>, vector<8x8xf32>,
    %50 = vector.extract_strided_slice %10 {offsets = [0, 16], sizes = [8, 8], strides = [1, 1]} : vector<8x32xf32> to vector<8x8xf32>
    %51 = vector.extract_strided_slice %15 {offsets = [0, 16], sizes = [12, 8], strides = [1, 1]} : vector<12x64xf32> to vector<12x8xf32>
    %52 = vector.extract_strided_slice %15 {offsets = [0, 48], sizes = [12, 8], strides = [1, 1]} : vector<12x64xf32> to vector<12x8xf32>
    %cst_28 = arith.constant dense<0.000000e+00> : vector<8x12xf32>
    %53 = tpu.matmul %50, %51, %cst_28 {dimension_numbers = #tpu.dot_dimension_numbers<[1], [1], [0], [0], [0, 0, 1, 0], [], []>} : vector<8x8xf32>, vector<12x8xf32>, vector<8x12xf32> -> vector<8x12xf32>
    %54 = arith.addf %53, %5 : vector<8x12xf32>
    %cst_29 = arith.constant dense<0xFF800000> : vector<8xf32>
    %55 = vector.multi_reduction <maximumf>, %54, %cst_29 [1] : vector<8x12xf32> to vector<8xf32>
    %56 = vector.shape_cast %55 : vector<8xf32> to vector<8x1xf32>
    %57 = vector.broadcast %56 : vector<8x1xf32> to vector<8x12xf32>
    %58 = arith.subf %54, %57 : vector<8x12xf32>
    %59 = math.exp %58 : vector<8x12xf32>
    %cst_30 = arith.constant dense<0.000000e+00> : vector<8xf32>
    %60 = vector.multi_reduction <add>, %59, %cst_30 [1] : vector<8x12xf32> to vector<8xf32>
    %61 = vector.shape_cast %60 : vector<8xf32> to vector<8x1xf32>
    %62 = tpu.reciprocal %61 : vector<8x1xf32> -> vector<8x1xf32>
    %63 = vector.broadcast %62 : vector<8x1xf32> to vector<8x12xf32>
    %64 = arith.mulf %59, %63 : vector<8x12xf32>
    %cst_31 = arith.constant dense<0.000000e+00> : vector<8x8xf32>
    %65 = tpu.matmul %64, %52, %cst_31 {dimension_numbers = #tpu.dot_dimension_numbers<[1], [0], [0], [1], [0, 0, 1, 1], [], []>} : vector<8x12xf32>, vector<12x8xf32>, vector<8x8xf32> -> vector<8x8xf32>
    %c0_32 = arith.constant 0 : index
    %c16 = arith.constant 16 : index
    %66 = vector.load %arg11[%c0_32, %c16] : memref<8x32xf32, #tpu.memory_space<vmem>>, vector<8x8xf32>
    tpu.vector_store %arg11[%c0_32, %c16], %65 {strides = array<i32>} : memref<8x32xf32, #tpu.memory_space<vmem>>, vector<8x8xf32>,
    %67 = vector.extract_strided_slice %10 {offsets = [0, 24], sizes = [8, 8], strides = [1, 1]} : vector<8x32xf32> to vector<8x8xf32>
    %68 = vector.extract_strided_slice %15 {offsets = [0, 24], sizes = [12, 8], strides = [1, 1]} : vector<12x64xf32> to vector<12x8xf32>
    %69 = vector.extract_strided_slice %15 {offsets = [0, 56], sizes = [12, 8], strides = [1, 1]} : vector<12x64xf32> to vector<12x8xf32>
    %cst_33 = arith.constant dense<0.000000e+00> : vector<8x12xf32>
    %70 = tpu.matmul %67, %68, %cst_33 {dimension_numbers = #tpu.dot_dimension_numbers<[1], [1], [0], [0], [0, 0, 1, 0], [], []>} : vector<8x8xf32>, vector<12x8xf32>, vector<8x12xf32> -> vector<8x12xf32>
    %71 = arith.addf %70, %5 : vector<8x12xf32>
    %cst_34 = arith.constant dense<0xFF800000> : vector<8xf32>
    %72 = vector.multi_reduction <maximumf>, %71, %cst_34 [1] : vector<8x12xf32> to vector<8xf32>
    %73 = vector.shape_cast %72 : vector<8xf32> to vector<8x1xf32>
    %74 = vector.broadcast %73 : vector<8x1xf32> to vector<8x12xf32>
    %75 = arith.subf %71, %74 : vector<8x12xf32>
    %76 = math.exp %75 : vector<8x12xf32>
    %cst_35 = arith.constant dense<0.000000e+00> : vector<8xf32>
    %77 = vector.multi_reduction <add>, %76, %cst_35 [1] : vector<8x12xf32> to vector<8xf32>
    %78 = vector.shape_cast %77 : vector<8xf32> to vector<8x1xf32>
    %79 = tpu.reciprocal %78 : vector<8x1xf32> -> vector<8x1xf32>
    %80 = vector.broadcast %79 : vector<8x1xf32> to vector<8x12xf32>
    %81 = arith.mulf %76, %80 : vector<8x12xf32>
    %cst_36 = arith.constant dense<0.000000e+00> : vector<8x8xf32>
    %82 = tpu.matmul %81, %69, %cst_36 {dimension_numbers = #tpu.dot_dimension_numbers<[1], [0], [0], [1], [0, 0, 1, 1], [], []>} : vector<8x12xf32>, vector<12x8xf32>, vector<8x8xf32> -> vector<8x8xf32>
    %c0_37 = arith.constant 0 : index
    %c24 = arith.constant 24 : index
    %83 = vector.load %arg11[%c0_37, %c24] : memref<8x32xf32, #tpu.memory_space<vmem>>, vector<8x8xf32>
    tpu.vector_store %arg11[%c0_37, %c24], %82 {strides = array<i32>} : memref<8x32xf32, #tpu.memory_space<vmem>>, vector<8x8xf32>,
    %c0_38 = arith.constant 0 : index
    %c0_39 = arith.constant 0 : index
    %84 = vector.load %arg11[%c0_38, %c0_39] : memref<8x32xf32, #tpu.memory_space<vmem>>, vector<8x32xf32>
    %c0_40 = arith.constant 0 : index
    %c0_41 = arith.constant 0 : index
    %85 = vector.load %arg8[%c0_40, %c0_41] : memref<32x16xf32, #tpu.memory_space<vmem>>, vector<32x16xf32>
    %cst_42 = arith.constant dense<0.000000e+00> : vector<8x16xf32>
    %86 = tpu.matmul %84, %85, %cst_42 {dimension_numbers = #tpu.dot_dimension_numbers<[1], [0], [0], [1], [0, 0, 1, 1], [], []>} : vector<8x32xf32>, vector<32x16xf32>, vector<8x16xf32> -> vector<8x16xf32>
    %c0_43 = arith.constant 0 : index
    %c0_44 = arith.constant 0 : index
    %87 = vector.load %arg9[%c0_43, %c0_44] : memref<1x16xf32, #tpu.memory_space<vmem>>, vector<1x16xf32>
    %88 = vector.broadcast %87 : vector<1x16xf32> to vector<8x16xf32>
    %89 = arith.addf %86, %88 : vector<8x16xf32>
    %c0_45 = arith.constant 0 : index
    %c0_46 = arith.constant 0 : index
    %c0_47 = arith.constant 0 : index
    %90 = vector.load %arg10[%c0_45, %c0_46, %c0_47] : memref<1x8x16xf32, #tpu.memory_space<vmem>>, vector<1x8x16xf32>
    %91 = vector.shape_cast %90 : vector<1x8x16xf32> to vector<8x16xf32>
    %92 = vector.shape_cast %89 : vector<8x16xf32> to vector<1x8x16xf32>
    tpu.vector_store %arg10[%c0_45, %c0_46, %c0_47], %92 {strides = array<i32>} : memref<1x8x16xf32, #tpu.memory_space<vmem>>, vector<1x8x16xf32>,
    return
  }
  func.func @transform_0(%arg0: i32) -> (i32, i32, i32) {
    %c0_i32 = arith.constant 0 : i32
    %c0_i32_0 = arith.constant 0 : i32
    %c0_i32_1 = arith.constant 0 : i32
    return %arg0, %c0_i32, %c0_i32_0 : i32, i32, i32
  }
  func.func @transform_1(%arg0: i32) -> (i32, i32, i32) {
    %c0_i32 = arith.constant 0 : i32
    %c0_i32_0 = arith.constant 0 : i32
    %c0_i32_1 = arith.constant 0 : i32
    return %arg0, %c0_i32, %c0_i32_0 : i32, i32, i32
  }
  func.func @transform_2(%arg0: i32) -> (i32, i32, i32) {
    %c0_i32 = arith.constant 0 : i32
    %c0_i32_0 = arith.constant 0 : i32
    %c0_i32_1 = arith.constant 0 : i32
    return %arg0, %c0_i32, %c0_i32_0 : i32, i32, i32
  }
  func.func @transform_3(%arg0: i32) -> (i32, i32) {
    %c0_i32 = arith.constant 0 : i32
    %c0_i32_0 = arith.constant 0 : i32
    %c0_i32_1 = arith.constant 0 : i32
    return %c0_i32, %c0_i32_0 : i32, i32
  }
  func.func @transform_4(%arg0: i32) -> (i32, i32) {
    %c0_i32 = arith.constant 0 : i32
    %c0_i32_0 = arith.constant 0 : i32
    %c0_i32_1 = arith.constant 0 : i32
    return %c0_i32, %c0_i32_0 : i32, i32
  }
  func.func @transform_5(%arg0: i32) -> (i32, i32) {
    %c0_i32 = arith.constant 0 : i32
    %c0_i32_0 = arith.constant 0 : i32
    %c0_i32_1 = arith.constant 0 : i32
    return %c0_i32, %c0_i32_0 : i32, i32
  }
  func.func @transform_6(%arg0: i32) -> (i32, i32) {
    %c0_i32 = arith.constant 0 : i32
    %c0_i32_0 = arith.constant 0 : i32
    %c0_i32_1 = arith.constant 0 : i32
    return %c0_i32, %c0_i32_0 : i32, i32
  }
  func.func @transform_7(%arg0: i32) -> (i32, i32) {
    %c0_i32 = arith.constant 0 : i32
    %c0_i32_0 = arith.constant 0 : i32
    %c0_i32_1 = arith.constant 0 : i32
    return %c0_i32, %c0_i32_0 : i32, i32
  }
  func.func @transform_8(%arg0: i32) -> (i32, i32) {
    %c0_i32 = arith.constant 0 : i32
    %c0_i32_0 = arith.constant 0 : i32
    %c0_i32_1 = arith.constant 0 : i32
    return %c0_i32, %c0_i32_0 : i32, i32
  }
  func.func @transform_9(%arg0: i32) -> (i32, i32, i32) {
    %c0_i32 = arith.constant 0 : i32
    %c0_i32_0 = arith.constant 0 : i32
    %c0_i32_1 = arith.constant 0 : i32
    return %arg0, %c0_i32, %c0_i32_0 : i32, i32, i32
  }
}

</mosaic_0001>

<llo_original>
// kernel: tpu_custom_call.1
$region0: #{tpu_custom_call.1}
  #allocation0 [shape = 'u32[]', space=smem, size = 0x4, offset = 0x4, fixed_abs, tag = 'smem constant byte address 0x4 - core index']
  #allocation1 [shape = 'u32[144,128]{1,0:T(1,128)}', space=vmem, size = 0x12000, scoped, tag = 'internal scratch']
  #allocation2 [shape = 'f32[8,32]{1,0:T(8,128)}', space=vmem, size = 0x1000, scoped, tag = 'scratch operand']
  %s0 = inlined_call_operand.vmem [shape: f32[2,8,16], index: 0, kind: input, shape index: {}]
  %s1 = inlined_call_operand.vmem [shape: f32[2,12,16], index: 1, kind: input, shape index: {}]
  %s2 = inlined_call_operand.vmem [shape: f32[2,8,12], index: 2, kind: input, shape index: {}]
  %s3 = inlined_call_operand.vmem [shape: f32[16,32], index: 3, kind: input, shape index: {}]
  %s4 = inlined_call_operand.vmem [shape: f32[1,32], index: 4, kind: input, shape index: {}]
  %s5 = inlined_call_operand.vmem [shape: f32[16,64], index: 5, kind: input, shape index: {}]
  %s6 = inlined_call_operand.vmem [shape: f32[1,64], index: 6, kind: input, shape index: {}]
  %s7 = inlined_call_operand.vmem [shape: f32[32,16], index: 7, kind: input, shape index: {}]
  %s8 = inlined_call_operand.vmem [shape: f32[1,16], index: 8, kind: input, shape index: {}]
  %s9 = inlined_call_operand.hbm [shape: f32[2,8,16], index: 9, kind: output, shape index: {}]
  %s10 = sld [smem:[#allocation0]]
  $region69: #{tpu_custom_call.1} parent=0
    _
  %s12 = ssub.s32 1, %s10
  %s13 = scalar_select 0, %s12, %s10
  $region1: #{tpu_custom_call.1} parent=0
    #allocation3 [shape = 'u8[8192]{0}', space=vmem, size = 0x2000, scoped, tag = 'output window, operand 0']
    #allocation4 [shape = 's32[2]{0}', space=sflag, size = 0x8, scoped, tag = 'scoped memory for tpu_custom_call.1']
    %14 = vsyncpa [#allocation4], 0
    %s15 = scalar_lea.sflag [#allocation4], 1
    %16 = vsyncpa %s15, 0
    loop: start=0, step=1, limit=4
    $region2: #{tpu_custom_call.1} parent=1 // loop_pre_header
      _
    $region3: #{tpu_custom_call.1} parent=1 // loop_header
      %s18 = sphi 0, %s22
      %p19 = scmp.ge.s32.totalorder %s18, 4
      %s28 = sphi 0, %s30
      %s31 = sphi 0, %s28
      %s32 = sphi 0, %s31
      %s48 = sphi 0, %s32
      %s54 = sphi 0, %s56
      %s57 = sphi 0, %s54
      %s58 = sphi 0, %s57
      %s74 = sphi 0, %s58
      %s80 = sphi 0, %s82
      %s83 = sphi 0, %s80
      %s84 = sphi 0, %s83
      %s100 = sphi 0, %s84
      %s104 = sphi 0, %s104
      %s106 = sphi 0, %s104
      %s107 = sphi 0, %s106
      %s121 = sphi 0, %s107
      %s125 = sphi 0, %s125
      %s127 = sphi 0, %s125
      %s128 = sphi 0, %s127
      %s142 = sphi 0, %s128
      %s146 = sphi 0, %s146
      %s148 = sphi 0, %s146
      %s149 = sphi 0, %s148
      %s163 = sphi 0, %s149
      %s167 = sphi 0, %s167
      %s169 = sphi 0, %s167
      %s170 = sphi 0, %s169
      %s184 = sphi 0, %s170
      %s188 = sphi 0, %s188
      %s190 = sphi 0, %s188
      %s191 = sphi 0, %s190
      %s205 = sphi 0, %s191
      %s209 = sphi 0, %s209
      %s211 = sphi 0, %s209
      %s212 = sphi 0, %s211
      %s226 = sphi 0, %s212
      %s232 = sphi 0, %s234
      %s235 = sphi 0, %s232
      %s236 = sphi 0, %s235
      %s252 = sphi 0, %s236
    $region4: #{tpu_custom_call.1} parent=1 // loop_header_branch
      %21 = sbr.rel (%p19) target = $region8
    $region5: #{tpu_custom_call.1} parent=1 // loop_body
      %s23 = ssub.s32 %s18, 1
      %s24 = ssub.s32 %s18, 2
      %s25 = sadd.s32 %s18, 1
      %s26 = ssub.s32 %s18, %s25
      %p27 = scmp.eq.s32.totalorder %s26, 0
      %s29 = sadd.s32 %s28, 1
      %s30 = scalar_select %p27, %s28, %s29
      %p33 = pneg %p27
      %p34 = scmp.eq.s32.totalorder %s18, 1
      %p35 = por %p33, %p34
      %p36 = scmp.ne.s32.totalorder %s28, %s31
      %p37 = scmp.eq.s32.totalorder %s18, 0
      %p38 = por %p36, %p37
      %p39 = scmp.ne.s32.totalorder %s28, %s31
      %p40 = scmp.eq.s32.totalorder %s23, 1
      %p41 = por %p39, %p40
      %p42 = scmp.ne.s32.totalorder %s31, %s32
      %p43 = scmp.eq.s32.totalorder %s23, 0
      %p44 = por %p42, %p43
      %p45 = scmp.ne.s32.totalorder %s31, %s32
      %p46 = scmp.eq.s32.totalorder %s24, 1
      %p47 = por %p45, %p46
      %p49 = scmp.ne.s32.totalorder %s32, %s48
      %p50 = scmp.eq.s32.totalorder %s24, 0
      %p51 = por %p49, %p50
      %s52 = ssub.s32 %s18, %s25
      %p53 = scmp.eq.s32.totalorder %s52, 0
      %s55 = sadd.s32 %s54, 1
      %s56 = scalar_select %p53, %s54, %s55
      %p59 = pneg %p53
      %p60 = scmp.eq.s32.totalorder %s18, 1
      %p61 = por %p59, %p60
      %p62 = scmp.ne.s32.totalorder %s54, %s57
      %p63 = scmp.eq.s32.totalorder %s18, 0
      %p64 = por %p62, %p63
      %p65 = scmp.ne.s32.totalorder %s54, %s57
      %p66 = scmp.eq.s32.totalorder %s23, 1
      %p67 = por %p65, %p66
      %p68 = scmp.ne.s32.totalorder %s57, %s58
      %p69 = scmp.eq.s32.totalorder %s23, 0
      %p70 = por %p68, %p69
      %p71 = scmp.ne.s32.totalorder %s57, %s58
      %p72 = scmp.eq.s32.totalorder %s24, 1
      %p73 = por %p71, %p72
      %p75 = scmp.ne.s32.totalorder %s58, %s74
      %p76 = scmp.eq.s32.totalorder %s24, 0
      %p77 = por %p75, %p76
      %s78 = ssub.s32 %s18, %s25
      %p79 = scmp.eq.s32.totalorder %s78, 0
      %s81 = sadd.s32 %s80, 1
      %s82 = scalar_select %p79, %s80, %s81
      %p85 = pneg %p79
      %p86 = scmp.eq.s32.totalorder %s18, 1
      %p87 = por %p85, %p86
      %p88 = scmp.ne.s32.totalorder %s80, %s83
      %p89 = scmp.eq.s32.totalorder %s18, 0
      %p90 = por %p88, %p89
      %p91 = scmp.ne.s32.totalorder %s80, %s83
      %p92 = scmp.eq.s32.totalorder %s23, 1
      %p93 = por %p91, %p92
      %p94 = scmp.ne.s32.totalorder %s83, %s84
      %p95 = scmp.eq.s32.totalorder %s23, 0
      %p96 = por %p94, %p95
      %p97 = scmp.ne.s32.totalorder %s83, %s84
      %p98 = scmp.eq.s32.totalorder %s24, 1
      %p99 = por %p97, %p98
      %p101 = scmp.ne.s32.totalorder %s84, %s100
      %p102 = scmp.eq.s32.totalorder %s24, 0
      %p103 = por %p101, %p102
      %s105 = sadd.s32 %s104, 1
      %p108 = scmp.eq.s32.totalorder %s18, 1
      %p109 = scmp.ne.s32.totalorder %s104, %s106
      %p110 = scmp.eq.s32.totalorder %s18, 0
      %p111 = por %p109, %p110
      %p112 = scmp.ne.s32.totalorder %s104, %s106
      %p113 = scmp.eq.s32.totalorder %s23, 1
      %p114 = por %p112, %p113
      %p115 = scmp.ne.s32.totalorder %s106, %s107
      %p116 = scmp.eq.s32.totalorder %s23, 0
      %p117 = por %p115, %p116
      %p118 = scmp.ne.s32.totalorder %s106, %s107
      %p119 = scmp.eq.s32.totalorder %s24, 1
      %p120 = por %p118, %p119
      %p122 = scmp.ne.s32.totalorder %s107, %s121
      %p123 = scmp.eq.s32.totalorder %s24, 0
      %p124 = por %p122, %p123
      %s126 = sadd.s32 %s125, 1
      %p129 = scmp.eq.s32.totalorder %s18, 1
      %p130 = scmp.ne.s32.totalorder %s125, %s127
      %p131 = scmp.eq.s32.totalorder %s18, 0
      %p132 = por %p130, %p131
      %p133 = scmp.ne.s32.totalorder %s125, %s127
      %p134 = scmp.eq.s32.totalorder %s23, 1
      %p135 = por %p133, %p134
      %p136 = scmp.ne.s32.totalorder %s127, %s128
      %p137 = scmp.eq.s32.totalorder %s23, 0
      %p138 = por %p136, %p137
      %p139 = scmp.ne.s32.totalorder %s127, %s128
      %p140 = scmp.eq.s32.totalorder %s24, 1
      %p141 = por %p139, %p140
      %p143 = scmp.ne.s32.totalorder %s128, %s142
      %p144 = scmp.eq.s32.totalorder %s24, 0
      %p145 = por %p143, %p144
      %s147 = sadd.s32 %s146, 1
      %p150 = scmp.eq.s32.totalorder %s18, 1
      %p151 = scmp.ne.s32.totalorder %s146, %s148
      %p152 = scmp.eq.s32.totalorder %s18, 0
      %p153 = por %p151, %p152
      %p154 = scmp.ne.s32.totalorder %s146, %s148
      %p155 = scmp.eq.s32.totalorder %s23, 1
      %p156 = por %p154, %p155
      %p157 = scmp.ne.s32.totalorder %s148, %s149
      %p158 = scmp.eq.s32.totalorder %s23, 0
      %p159 = por %p157, %p158
      %p160 = scmp.ne.s32.totalorder %s148, %s149
      %p161 = scmp.eq.s32.totalorder %s24, 1
      %p162 = por %p160, %p161
      %p164 = scmp.ne.s32.totalorder %s149, %s163
      %p165 = scmp.eq.s32.totalorder %s24, 0
      %p166 = por %p164, %p165
      %s168 = sadd.s32 %s167, 1
      %p171 = scmp.eq.s32.totalorder %s18, 1
      %p172 = scmp.ne.s32.totalorder %s167, %s169
      %p173 = scmp.eq.s32.totalorder %s18, 0
      %p174 = por %p172, %p173
      %p175 = scmp.ne.s32.totalorder %s167, %s169
      %p176 = scmp.eq.s32.totalorder %s23, 1
      %p177 = por %p175, %p176
      %p178 = scmp.ne.s32.totalorder %s169, %s170
      %p179 = scmp.eq.s32.totalorder %s23, 0
      %p180 = por %p178, %p179
      %p181 = scmp.ne.s32.totalorder %s169, %s170
      %p182 = scmp.eq.s32.totalorder %s24, 1
      %p183 = por %p181, %p182
      %p185 = scmp.ne.s32.totalorder %s170, %s184
      %p186 = scmp.eq.s32.totalorder %s24, 0
      %p187 = por %p185, %p186
      %s189 = sadd.s32 %s188, 1
      %p192 = scmp.eq.s32.totalorder %s18, 1
      %p193 = scmp.ne.s32.totalorder %s188, %s190
      %p194 = scmp.eq.s32.totalorder %s18, 0
      %p195 = por %p193, %p194
      %p196 = scmp.ne.s32.totalorder %s188, %s190
      %p197 = scmp.eq.s32.totalorder %s23, 1
      %p198 = por %p196, %p197
      %p199 = scmp.ne.s32.totalorder %s190, %s191
      %p200 = scmp.eq.s32.totalorder %s23, 0
      %p201 = por %p199, %p200
      %p202 = scmp.ne.s32.totalorder %s190, %s191
      %p203 = scmp.eq.s32.totalorder %s24, 1
      %p204 = por %p202, %p203
      %p206 = scmp.ne.s32.totalorder %s191, %s205
      %p207 = scmp.eq.s32.totalorder %s24, 0
      %p208 = por %p206, %p207
      %s210 = sadd.s32 %s209, 1
      %p213 = scmp.eq.s32.totalorder %s18, 1
      %p214 = scmp.ne.s32.totalorder %s209, %s211
      %p215 = scmp.eq.s32.totalorder %s18, 0
      %p216 = por %p214, %p215
      %p217 = scmp.ne.s32.totalorder %s209, %s211
      %p218 = scmp.eq.s32.totalorder %s23, 1
      %p219 = por %p217, %p218
      %p220 = scmp.ne.s32.totalorder %s211, %s212
      %p221 = scmp.eq.s32.totalorder %s23, 0
      %p222 = por %p220, %p221
      %p223 = scmp.ne.s32.totalorder %s211, %s212
      %p224 = scmp.eq.s32.totalorder %s24, 1
      %p225 = por %p223, %p224
      %p227 = scmp.ne.s32.totalorder %s212, %s226
      %p228 = scmp.eq.s32.totalorder %s24, 0
      %p229 = por %p227, %p228
      %s230 = ssub.s32 %s18, %s25
      %p231 = scmp.eq.s32.totalorder %s230, 0
      %s233 = sadd.s32 %s232, 1
      %s234 = scalar_select %p231, %s232, %s233
      %p237 = pneg %p231
      %p238 = scmp.eq.s32.totalorder %s18, 1
      %p239 = por %p237, %p238
      %p240 = scmp.ne.s32.totalorder %s232, %s235
      %p241 = scmp.eq.s32.totalorder %s18, 0
      %p242 = por %p240, %p241
      %p243 = scmp.ne.s32.totalorder %s232, %s235
      %p244 = scmp.eq.s32.totalorder %s23, 1
      %p245 = por %p243, %p244
      %p246 = scmp.ne.s32.totalorder %s235, %s236
      %p247 = scmp.eq.s32.totalorder %s23, 0
      %p248 = por %p246, %p247
      %p249 = scmp.ne.s32.totalorder %s235, %s236
      %p250 = scmp.eq.s32.totalorder %s24, 1
      %p251 = por %p249, %p250
      %p253 = scmp.ne.s32.totalorder %s236, %s252
      %p254 = scmp.eq.s32.totalorder %s24, 0
      %p255 = por %p253, %p254
      %p256 = scmp.le.s32.totalorder 1, %s18
      %p257 = scmp.lt.s32.totalorder %s18, 3
      %p258 = pnand %p256, %p257
      %p259 = pneg %p258
      // Predicated region
      $region9: #{tpu_custom_call.1} parent=5 // pred_check
        _
      $region10: #{tpu_custom_call.1} parent=5 // pred_check_branch
        %261 = sbr.rel (%p258) target = $region12
      $region11: #{tpu_custom_call.1} parent=5 // pred_region
        %s262 = ssub.s32 %s18, 1
        // Predicated region
        $region13: #{tpu_custom_call.1} parent=11 // pred_check
          %p263 = pneg %p117
        $region14: #{tpu_custom_call.1} parent=11 // pred_check_branch
          %265 = sbr.rel (%p263) target = $region16
        $region15: #{tpu_custom_call.1} parent=11 // pred_region
          _
        $region16: #{tpu_custom_call.1} parent=11 // pred_fallthru
          _
        // Predicated region
        $region17: #{tpu_custom_call.1} parent=11 // pred_check
          %p266 = pneg %p138
        $region18: #{tpu_custom_call.1} parent=11 // pred_check_branch
          %268 = sbr.rel (%p266) target = $region20
        $region19: #{tpu_custom_call.1} parent=11 // pred_region
          _
        $region20: #{tpu_custom_call.1} parent=11 // pred_fallthru
          _
        // Predicated region
        $region21: #{tpu_custom_call.1} parent=11 // pred_check
          %p269 = pneg %p159
        $region22: #{tpu_custom_call.1} parent=11 // pred_check_branch
          %271 = sbr.rel (%p269) target = $region24
        $region23: #{tpu_custom_call.1} parent=11 // pred_region
          _
        $region24: #{tpu_custom_call.1} parent=11 // pred_fallthru
          _
        // Predicated region
        $region25: #{tpu_custom_call.1} parent=11 // pred_check
          %p272 = pneg %p180
        $region26: #{tpu_custom_call.1} parent=11 // pred_check_branch
          %274 = sbr.rel (%p272) target = $region28
        $region27: #{tpu_custom_call.1} parent=11 // pred_region
          _
        $region28: #{tpu_custom_call.1} parent=11 // pred_fallthru
          _
        // Predicated region
        $region29: #{tpu_custom_call.1} parent=11 // pred_check
          %p275 = pneg %p201
        $region30: #{tpu_custom_call.1} parent=11 // pred_check_branch
          %277 = sbr.rel (%p275) target = $region32
        $region31: #{tpu_custom_call.1} parent=11 // pred_region
          _
        $region32: #{tpu_custom_call.1} parent=11 // pred_fallthru
          _
        // Predicated region
        $region33: #{tpu_custom_call.1} parent=11 // pred_check
          %p278 = pneg %p222
        $region34: #{tpu_custom_call.1} parent=11 // pred_check_branch
          %280 = sbr.rel (%p278) target = $region36
        $region35: #{tpu_custom_call.1} parent=11 // pred_region
          _
        $region36: #{tpu_custom_call.1} parent=11 // pred_fallthru
          _
      $region12: #{tpu_custom_call.1} parent=5 // pred_fallthru
        _
      %p281 = scmp.lt.s32.totalorder %s18, 2
      // Predicated region
      $region37: #{tpu_custom_call.1} parent=5 // pred_check
        %p282 = pneg %p281
      $region38: #{tpu_custom_call.1} parent=5 // pred_check_branch
        %284 = sbr.rel (%p282) target = $region40
      $region39: #{tpu_custom_call.1} parent=5 // pred_region
        // Predicated region
        $region41: #{tpu_custom_call.1} parent=39 // pred_check
          %p285 = pneg %p38
        $region42: #{tpu_custom_call.1} parent=39 // pred_check_branch
          %287 = sbr.rel (%p285) target = $region44
        $region43: #{tpu_custom_call.1} parent=39 // pred_region
          %p288 = scmp.lt.s32.totalorder %s18, 1
          %s289 = scalar_select %p288, %s18, 1
          %s290 = smul.addr %s289, 8
          %s291 = scalar_lea.vmem %s0, %s290
        $region44: #{tpu_custom_call.1} parent=39 // pred_fallthru
          _
        // Predicated region
        $region45: #{tpu_custom_call.1} parent=39 // pred_check
          %p292 = pneg %p64
        $region46: #{tpu_custom_call.1} parent=39 // pred_check_branch
          %294 = sbr.rel (%p292) target = $region48
        $region47: #{tpu_custom_call.1} parent=39 // pred_region
          %p295 = scmp.lt.s32.totalorder %s18, 1
          %s296 = scalar_select %p295, %s18, 1
          %s297 = smul.addr %s296, 2
          %s298 = smul.addr %s297, 8
          %s299 = scalar_lea.vmem %s1, %s298
        $region48: #{tpu_custom_call.1} parent=39 // pred_fallthru
          _
        // Predicated region
        $region49: #{tpu_custom_call.1} parent=39 // pred_check
          %p300 = pneg %p90
        $region50: #{tpu_custom_call.1} parent=39 // pred_check_branch
          %302 = sbr.rel (%p300) target = $region52
        $region51: #{tpu_custom_call.1} parent=39 // pred_region
          %p303 = scmp.lt.s32.totalorder %s18, 1
          %s304 = scalar_select %p303, %s18, 1
          %s305 = smul.addr %s304, 8
          %s306 = scalar_lea.vmem %s2, %s305
        $region52: #{tpu_custom_call.1} parent=39 // pred_fallthru
          _
      $region40: #{tpu_custom_call.1} parent=5 // pred_fallthru
        _
      %p307 = scmp.le.s32.totalorder 1, %s18
      %p308 = scmp.lt.s32.totalorder %s18, 3
      %p309 = pnand %p307, %p308
      %p310 = pneg %p309
      // Predicated region
      $region53: #{tpu_custom_call.1} parent=5 // pred_check
        _
      $region54: #{tpu_custom_call.1} parent=5 // pred_check_branch
        %312 = sbr.rel (%p309) target = $region56
      $region55: #{tpu_custom_call.1} parent=5 // pred_region
        %s313 = ssub.s32 %s18, 1
        %p314 = scmp.lt.s32.totalorder %s23, 1
        %s315 = scalar_select %p314, %s23, 1
        %s316 = smul.addr %s315, 8
        %s317 = scalar_lea.vmem %s0, %s316
        %p318 = pneg %p44
        %p319 = pneg %p41
        %p320 = scmp.lt.s32.totalorder %s23, 1
        %s321 = scalar_select %p320, %s23, 1
        %s322 = smul.addr %s321, 2
        %s323 = smul.addr %s322, 8
        %s324 = scalar_lea.vmem %s1, %s323
        %p325 = pneg %p70
        %p326 = pneg %p67
        %p327 = scmp.lt.s32.totalorder %s23, 1
        %s328 = scalar_select %p327, %s23, 1
        %s329 = smul.addr %s328, 8
        %s330 = scalar_lea.vmem %s2, %s329
        %p331 = pneg %p96
        %p332 = pneg %p93
        %p333 = pneg %p117
        %p334 = pneg %p114
        %p335 = pneg %p138
        %p336 = pneg %p135
        %p337 = pneg %p159
        %p338 = pneg %p156
        %p339 = pneg %p180
        %p340 = pneg %p177
        %p341 = pneg %p201
        %p342 = pneg %p198
        %p343 = pneg %p222
        %p344 = pneg %p219
        %p345 = pneg %p248
        %p346 = pneg %p245
        %s347 = sand.u32 %s235, 1
        %s348 = scalar_lea.sflag [#allocation4], %s347
        %s349 = sand.u32 %s235, 1
        %s350 = smul.addr %s349, 8
        %s351 = scalar_lea.vmem [#allocation3], %s350
        %p352 = scmp.lt.s32.totalorder %s23, 1
        %s353 = scalar_select %p352, %s23, 1
        %s354 = smul.addr %s353, 8
        %s355 = scalar_lea.vmem %s0, %s354
        %p356 = scmp.lt.s32.totalorder %s23, 1
        %s357 = scalar_select %p356, %s23, 1
        %s358 = smul.addr %s357, 2
        %s359 = smul.addr %s358, 8
        %s360 = scalar_lea.vmem %s1, %s359
        %p361 = scmp.lt.s32.totalorder %s23, 1
        %s362 = scalar_select %p361, %s23, 1
        %s363 = smul.addr %s362, 8
        %s364 = scalar_lea.vmem %s2, %s363
        %v365 = vld [vmem:[%s355] sm:$0xff]
        %v366 = vld [vmem:[%s360] sm:$0xff]
        %v367 = vld [vmem:[%s360 + $0x8] sm:$0xf]
        %v368 = vld [vmem:[%s364] sm:$0xff]
        %v369 = vld [vmem:[%s3] sm:$0xff]
        %v370 = vld [vmem:[%s3 + $0x8] sm:$0xff]
        %v371 = vld [vmem:[%s4] sm:$0x1]
        %v373 = vlaneseq
        %v374 = vshrl.u32 %v373, 7
        %v375 = vsub.s32 0, %v374
        %v376 = vrot.slane %v371, %v375
        %vm378 = vcmask 130048
        %v380 = vsel %vm378, %v365, 0
        %382 = vmatprep.subr.mxu0 0.0
        %383 = vmatpush1.msra.mxu0 0.0
        %384 = vmatprep.subr.mxu0 0.0
        %385 = vmatpush1.msra.mxu0 0.0
        %386 = vmatprep.subr.mxu0 0.0
        %387 = vmatpush1.msra.mxu0 0.0
        %388 = vmatprep.subr.mxu0 0.0
        %389 = vmatpush1.msra.mxu0 0.0
        %390 = vmatprep.subr.mxu0 0.0
        %391 = vmatpush1.msra.mxu0 0.0
        %392 = vmatprep.subr.mxu0 0.0
        %393 = vmatpush1.msra.mxu0 0.0
        %394 = vmatprep.subr.mxu0 0.0
        %395 = vmatpush1.msra.mxu0 0.0
        %396 = vmatprep.subr.mxu0 0.0
        %397 = vmatpush1.msra.mxu0 0.0
        %398 = vmatprep.subr.mxu0 0.0
        %399 = vmatpush1.msra.mxu0 0.0
        %400 = vmatprep.subr.mxu0 0.0
        %401 = vmatpush1.msra.mxu0 0.0
        %402 = vmatprep.subr.mxu0 0.0
        %403 = vmatpush1.msra.mxu0 0.0
        %404 = vmatprep.subr.mxu0 0.0
        %405 = vmatpush1.msra.mxu0 0.0
        %406 = vmatprep.subr.mxu0 0.0
        %407 = vmatpush1.msra.mxu0 0.0
        %408 = vmatprep.subr.mxu0 0.0
        %409 = vmatpush1.msra.mxu0 0.0
        %410 = vmatprep.subr.mxu0 0.0
        %411 = vmatpush1.msra.mxu0 %v370
        %412 = vmatprep.subr.mxu0 0.0
        %413 = vmatpush1.msra.mxu0 %v369
        %414 = vmatprep.subr.mxu0 0.0
        %415 = vmatpush2.msra.mxu0 0.0
        %416 = vmatprep.subr.mxu0 0.0
        %417 = vmatpush2.msra.mxu0 0.0
        %418 = vmatprep.subr.mxu0 0.0
        %419 = vmatpush2.msra.mxu0 0.0
        %420 = vmatprep.subr.mxu0 0.0
        %421 = vmatpush2.msra.mxu0 0.0
        %422 = vmatprep.subr.mxu0 0.0
        %423 = vmatpush2.msra.mxu0 0.0
        %424 = vmatprep.subr.mxu0 0.0
        %425 = vmatpush2.msra.mxu0 0.0
        %426 = vmatprep.subr.mxu0 0.0
        %427 = vmatpush2.msra.mxu0 0.0
        %428 = vmatprep.subr.mxu0 0.0
        %429 = vmatpush2.msra.mxu0 0.0
        %430 = vmatprep.subr.mxu0 0.0
        %431 = vmatpush2.msra.mxu0 0.0
        %432 = vmatprep.subr.mxu0 0.0
        %433 = vmatpush2.msra.mxu0 0.0
        %434 = vmatprep.subr.mxu0 0.0
        %435 = vmatpush2.msra.mxu0 0.0
        %436 = vmatprep.subr.mxu0 0.0
        %437 = vmatpush2.msra.mxu0 0.0
        %438 = vmatprep.subr.mxu0 0.0
        %439 = vmatpush2.msra.mxu0 0.0
        %440 = vmatprep.subr.mxu0 0.0
        %441 = vmatpush2.msra.mxu0 0.0
        %442 = vmatprep.subr.mxu0 0.0
        %443 = vmatpush2.msra.mxu0 0.0
        %444 = vmatprep.subr.mxu0 0.0
        %445 = vmatpush2.msra.mxu0 0.0
        %446 = vmatprep.mubr.f32.mxu0 0.0
        %447 = vmatmul.mubr.f32.gmra.mxu0 %v380
        %v448 = vpop.f32.mrf.mxu0
        %v449 = vadd.f32 %v376, %v448
        %v450 = vpop.f32.mrf.mxu0
        %451 = vdwg.mxu0
        %v452 = vld [vmem:[%s5] sm:$0xff]
        %v453 = vld [vmem:[%s5 + $0x8] sm:$0xff]
        %v454 = vld [vmem:[%s6] sm:$0x1]
        %v456 = vlaneseq
        %v457 = vshrl.u32 %v456, 7
        %v458 = vsub.s32 0, %v457
        %v459 = vrot.slane %v454, %v458
        %v462 = vsel %vm378, %v366, 0
        %v465 = vsel %vm378, %v367, 0
        %467 = vmatprep.subr.mxu0 0.0
        %468 = vmatpush1.msra.mxu0 0.0
        %469 = vmatprep.subr.mxu0 0.0
        %470 = vmatpush1.msra.mxu0 0.0
        %471 = vmatprep.subr.mxu0 0.0
        %472 = vmatpush1.msra.mxu0 0.0
        %473 = vmatprep.subr.mxu0 0.0
        %474 = vmatpush1.msra.mxu0 0.0
        %475 = vmatprep.subr.mxu0 0.0
        %476 = vmatpush1.msra.mxu0 0.0
        %477 = vmatprep.subr.mxu0 0.0
        %478 = vmatpush1.msra.mxu0 0.0
        %479 = vmatprep.subr.mxu0 0.0
        %480 = vmatpush1.msra.mxu0 0.0
        %481 = vmatprep.subr.mxu0 0.0
        %482 = vmatpush1.msra.mxu0 0.0
        %483 = vmatprep.subr.mxu0 0.0
        %484 = vmatpush1.msra.mxu0 0.0
        %485 = vmatprep.subr.mxu0 0.0
        %486 = vmatpush1.msra.mxu0 0.0
        %487 = vmatprep.subr.mxu0 0.0
        %488 = vmatpush1.msra.mxu0 0.0
        %489 = vmatprep.subr.mxu0 0.0
        %490 = vmatpush1.msra.mxu0 0.0
        %491 = vmatprep.subr.mxu0 0.0
        %492 = vmatpush1.msra.mxu0 0.0
        %493 = vmatprep.subr.mxu0 0.0
        %494 = vmatpush1.msra.mxu0 0.0
        %495 = vmatprep.subr.mxu0 0.0
        %496 = vmatpush1.msra.mxu0 %v453
        %497 = vmatprep.subr.mxu0 0.0
        %498 = vmatpush1.msra.mxu0 %v452
        %499 = vmatprep.subr.mxu0 0.0
        %500 = vmatpush2.msra.mxu0 0.0
        %501 = vmatprep.subr.mxu0 0.0
        %502 = vmatpush2.msra.mxu0 0.0
        %503 = vmatprep.subr.mxu0 0.0
        %504 = vmatpush2.msra.mxu0 0.0
        %505 = vmatprep.subr.mxu0 0.0
        %506 = vmatpush2.msra.mxu0 0.0
        %507 = vmatprep.subr.mxu0 0.0
        %508 = vmatpush2.msra.mxu0 0.0
        %509 = vmatprep.subr.mxu0 0.0
        %510 = vmatpush2.msra.mxu0 0.0
        %511 = vmatprep.subr.mxu0 0.0
        %512 = vmatpush2.msra.mxu0 0.0
        %513 = vmatprep.subr.mxu0 0.0
        %514 = vmatpush2.msra.mxu0 0.0
        %515 = vmatprep.subr.mxu0 0.0
        %516 = vmatpush2.msra.mxu0 0.0
        %517 = vmatprep.subr.mxu0 0.0
        %518 = vmatpush2.msra.mxu0 0.0
        %519 = vmatprep.subr.mxu0 0.0
        %520 = vmatpush2.msra.mxu0 0.0
        %521 = vmatprep.subr.mxu0 0.0
        %522 = vmatpush2.msra.mxu0 0.0
        %523 = vmatprep.subr.mxu0 0.0
        %524 = vmatpush2.msra.mxu0 0.0
        %525 = vmatprep.subr.mxu0 0.0
        %526 = vmatpush2.msra.mxu0 0.0
        %527 = vmatprep.subr.mxu0 0.0
        %528 = vmatpush2.msra.mxu0 0.0
        %529 = vmatprep.subr.mxu0 0.0
        %530 = vmatpush2.msra.mxu0 0.0
        %531 = vmatprep.mubr.f32.mxu0 0.0
        %532 = vmatmul.mubr.f32.gmra.mxu0 %v462
        %v533 = vpop.f32.mrf.mxu0
        %v534 = vadd.f32 %v459, %v533
        %v535 = vpop.f32.mrf.mxu0
        %536 = vmatprep.mubr.f32.mxu0 0.0
        %537 = vmatmul.mubr.f32.gmra.mxu0 %v465
        %v538 = vpop.f32.mrf.mxu0
        %v539 = vadd.f32 %v459, %v538
        %v540 = vpop.f32.mrf.mxu0
        %541 = vdwg.mxu0
        %vm542 = vcmask 64512
        %v544 = vsel %vm542, %v449, 0
        %v547 = vsel %vm542, %v534, 0
        %v550 = vsel %vm542, %v539, 0
        %552 = vmatprep.subr.mxu0 0.0
        %553 = vmatpush1.xpose.msra.mxu0 0.0
        %554 = vmatprep.subr.mxu0 0.0
        %555 = vmatpush1.xpose.msra.mxu0 0.0
        %556 = vmatprep.subr.mxu0 0.0
        %557 = vmatpush1.xpose.msra.mxu0 0.0
        %558 = vmatprep.subr.mxu0 0.0
        %559 = vmatpush1.xpose.msra.mxu0 0.0
        %560 = vmatprep.subr.mxu0 0.0
        %561 = vmatpush1.xpose.msra.mxu0 0.0
        %562 = vmatprep.subr.mxu0 0.0
        %563 = vmatpush1.xpose.msra.mxu0 0.0
        %564 = vmatprep.subr.mxu0 0.0
        %565 = vmatpush1.xpose.msra.mxu0 0.0
        %566 = vmatprep.subr.mxu0 0.0
        %567 = vmatpush1.xpose.msra.mxu0 0.0
        %568 = vmatprep.subr.mxu0 0.0
        %569 = vmatpush1.xpose.msra.mxu0 0.0
        %570 = vmatprep.subr.mxu0 0.0
        %571 = vmatpush1.xpose.msra.mxu0 0.0
        %572 = vmatprep.subr.mxu0 0.0
        %573 = vmatpush1.xpose.msra.mxu0 0.0
        %574 = vmatprep.subr.mxu0 0.0
        %575 = vmatpush1.xpose.msra.mxu0 0.0
        %576 = vmatprep.subr.mxu0 0.0
        %577 = vmatpush1.xpose.msra.mxu0 0.0
        %578 = vmatprep.subr.mxu0 0.0
        %579 = vmatpush1.xpose.msra.mxu0 0.0
        %580 = vmatprep.subr.mxu0 0.0
        %581 = vmatpush1.xpose.msra.mxu0 %v550
        %582 = vmatprep.subr.mxu0 0.0
        %583 = vmatpush1.xpose.msra.mxu0 %v547
        %584 = vmatprep.subr.mxu0 0.0
        %585 = vmatpush2.xpose.msra.mxu0 0.0
        %586 = vmatprep.subr.mxu0 0.0
        %587 = vmatpush2.xpose.msra.mxu0 0.0
        %588 = vmatprep.subr.mxu0 0.0
        %589 = vmatpush2.xpose.msra.mxu0 0.0
        %590 = vmatprep.subr.mxu0 0.0
        %591 = vmatpush2.xpose.msra.mxu0 0.0
        %592 = vmatprep.subr.mxu0 0.0
        %593 = vmatpush2.xpose.msra.mxu0 0.0
        %594 = vmatprep.subr.mxu0 0.0
        %595 = vmatpush2.xpose.msra.mxu0 0.0
        %596 = vmatprep.subr.mxu0 0.0
        %597 = vmatpush2.xpose.msra.mxu0 0.0
        %598 = vmatprep.subr.mxu0 0.0
        %599 = vmatpush2.xpose.msra.mxu0 0.0
        %600 = vmatprep.subr.mxu0 0.0
        %601 = vmatpush2.xpose.msra.mxu0 0.0
        %602 = vmatprep.subr.mxu0 0.0
        %603 = vmatpush2.xpose.msra.mxu0 0.0
        %604 = vmatprep.subr.mxu0 0.0
        %605 = vmatpush2.xpose.msra.mxu0 0.0
        %606 = vmatprep.subr.mxu0 0.0
        %607 = vmatpush2.xpose.msra.mxu0 0.0
        %608 = vmatprep.subr.mxu0 0.0
        %609 = vmatpush2.xpose.msra.mxu0 0.0
        %610 = vmatprep.subr.mxu0 0.0
        %611 = vmatpush2.xpose.msra.mxu0 0.0
        %612 = vmatprep.subr.mxu0 0.0
        %613 = vmatpush2.xpose.msra.mxu0 0.0
        %614 = vmatprep.subr.mxu0 0.0
        %615 = vmatpush2.xpose.msra.mxu0 0.0
        %616 = vmatprep.mubr.f32.mxu0 0.0
        %617 = vmatmul.mubr.f32.gmra.mxu0 %v544
        %v618 = vpop.f32.mrf.mxu0
        %v619 = vadd.f32 %v368, %v618
        %v620 = vpop.f32.mrf.mxu0
        %621 = vdwg.mxu0
        %vm622 = vcmask 97280
        %v623 = vsel %vm622, %v619, -inf
        %624 = vmax.xlane.f32.xlu0 %v623
        %v625 = vpop.xlane.xlu0 %624
        %v626 = vsub.f32 %v619, %v625
        %v627 = vmul.f32 %v626, 1.442695
        %v628 = vpow.pop %v627
        %v629 = vsel %vm622, %v628, 0.0
        %630 = vadd.xlane.f32.xlu0 %v629
        %v631 = vpop.xlane.xlu0 %630
        %v632 = vrcp.pop %v631
        %v633 = vmul.f32 %v628, %v632
        %634 = vrot.lane.b32.xlu0 %v534, 96
        %v635 = vpop.permute.xlu0 %634
        %636 = vrot.lane.b32.xlu0 %v539, 96
        %v637 = vpop.permute.xlu0 %636
        %v640 = vsel %vm622, %v633, 0
        %vm642 = vcmask 1043456
        %v643 = vsel %vm642, %v637, 0
        %645 = vmatprep.subr.mxu0 0.0
        %646 = vmatpush1.msra.mxu0 0.0
        %647 = vmatprep.subr.mxu0 0.0
        %648 = vmatpush1.msra.mxu0 0.0
        %649 = vmatprep.subr.mxu0 0.0
        %650 = vmatpush1.msra.mxu0 0.0
        %651 = vmatprep.subr.mxu0 0.0
        %652 = vmatpush1.msra.mxu0 0.0
        %653 = vmatprep.subr.mxu0 0.0
        %654 = vmatpush1.msra.mxu0 0.0
        %655 = vmatprep.subr.mxu0 0.0
        %656 = vmatpush1.msra.mxu0 0.0
        %657 = vmatprep.subr.mxu0 0.0
        %658 = vmatpush1.msra.mxu0 0.0
        %659 = vmatprep.subr.mxu0 0.0
        %660 = vmatpush1.msra.mxu0 0.0
        %661 = vmatprep.subr.mxu0 0.0
        %662 = vmatpush1.msra.mxu0 0.0
        %663 = vmatprep.subr.mxu0 0.0
        %664 = vmatpush1.msra.mxu0 0.0
        %665 = vmatprep.subr.mxu0 0.0
        %666 = vmatpush1.msra.mxu0 0.0
        %667 = vmatprep.subr.mxu0 0.0
        %668 = vmatpush1.msra.mxu0 0.0
        %669 = vmatprep.subr.mxu0 0.0
        %670 = vmatpush1.msra.mxu0 0.0
        %671 = vmatprep.subr.mxu0 0.0
        %672 = vmatpush1.msra.mxu0 0.0
        %673 = vmatprep.subr.mxu0 0.0
        %674 = vmatpush1.msra.mxu0 %v643
        %675 = vmatprep.subr.mxu0 0.0
        %676 = vmatpush1.msra.mxu0 %v635
        %677 = vmatprep.subr.mxu0 0.0
        %678 = vmatpush2.msra.mxu0 0.0
        %679 = vmatprep.subr.mxu0 0.0
        %680 = vmatpush2.msra.mxu0 0.0
        %681 = vmatprep.subr.mxu0 0.0
        %682 = vmatpush2.msra.mxu0 0.0
        %683 = vmatprep.subr.mxu0 0.0
        %684 = vmatpush2.msra.mxu0 0.0
        %685 = vmatprep.subr.mxu0 0.0
        %686 = vmatpush2.msra.mxu0 0.0
        %687 = vmatprep.subr.mxu0 0.0
        %688 = vmatpush2.msra.mxu0 0.0
        %689 = vmatprep.subr.mxu0 0.0
        %690 = vmatpush2.msra.mxu0 0.0
        %691 = vmatprep.subr.mxu0 0.0
        %692 = vmatpush2.msra.mxu0 0.0
        %693 = vmatprep.subr.mxu0 0.0
        %694 = vmatpush2.msra.mxu0 0.0
        %695 = vmatprep.subr.mxu0 0.0
        %696 = vmatpush2.msra.mxu0 0.0
        %697 = vmatprep.subr.mxu0 0.0
        %698 = vmatpush2.msra.mxu0 0.0
        %699 = vmatprep.subr.mxu0 0.0
        %700 = vmatpush2.msra.mxu0 0.0
        %701 = vmatprep.subr.mxu0 0.0
        %702 = vmatpush2.msra.mxu0 0.0
        %703 = vmatprep.subr.mxu0 0.0
        %704 = vmatpush2.msra.mxu0 0.0
        %705 = vmatprep.subr.mxu0 0.0
        %706 = vmatpush2.msra.mxu0 0.0
        %707 = vmatprep.subr.mxu0 0.0
        %708 = vmatpush2.msra.mxu0 0.0
        %709 = vmatprep.mubr.f32.mxu0 0.0
        %710 = vmatmul.mubr.f32.gmra.mxu0 %v640
        %v711 = vpop.f32.mrf.mxu0
        %v712 = vadd.f32 0.0, %v711
        %v713 = vpop.f32.mrf.mxu0
        %714 = vdwg.mxu0
        %715 = vst.msk [vmem:[#allocation2] sm:$0xff] %vm542, %v712
        %716 = vrot.lane.b32.xlu0 %v449, 120
        %v717 = vpop.permute.xlu0 %716
        %718 = vrot.lane.b32.xlu0 %v534, 120
        %v719 = vpop.permute.xlu0 %718
        %720 = vrot.lane.b32.xlu0 %v539, 120
        %v721 = vpop.permute.xlu0 %720
        %v722 = vsel %vm542, %v717, 0
        %v724 = vsel %vm542, %v719, 0
        %v726 = vsel %vm542, %v721, 0
        %728 = vmatprep.subr.mxu0 0.0
        %729 = vmatpush1.xpose.msra.mxu0 0.0
        %730 = vmatprep.subr.mxu0 0.0
        %731 = vmatpush1.xpose.msra.mxu0 0.0
        %732 = vmatprep.subr.mxu0 0.0
        %733 = vmatpush1.xpose.msra.mxu0 0.0
        %734 = vmatprep.subr.mxu0 0.0
        %735 = vmatpush1.xpose.msra.mxu0 0.0
        %736 = vmatprep.subr.mxu0 0.0
        %737 = vmatpush1.xpose.msra.mxu0 0.0
        %738 = vmatprep.subr.mxu0 0.0
        %739 = vmatpush1.xpose.msra.mxu0 0.0
        %740 = vmatprep.subr.mxu0 0.0
        %741 = vmatpush1.xpose.msra.mxu0 0.0
        %742 = vmatprep.subr.mxu0 0.0
        %743 = vmatpush1.xpose.msra.mxu0 0.0
        %744 = vmatprep.subr.mxu0 0.0
        %745 = vmatpush1.xpose.msra.mxu0 0.0
        %746 = vmatprep.subr.mxu0 0.0
        %747 = vmatpush1.xpose.msra.mxu0 0.0
        %748 = vmatprep.subr.mxu0 0.0
        %749 = vmatpush1.xpose.msra.mxu0 0.0
        %750 = vmatprep.subr.mxu0 0.0
        %751 = vmatpush1.xpose.msra.mxu0 0.0
        %752 = vmatprep.subr.mxu0 0.0
        %753 = vmatpush1.xpose.msra.mxu0 0.0
        %754 = vmatprep.subr.mxu0 0.0
        %755 = vmatpush1.xpose.msra.mxu0 0.0
        %756 = vmatprep.subr.mxu0 0.0
        %757 = vmatpush1.xpose.msra.mxu0 %v726
        %758 = vmatprep.subr.mxu0 0.0
        %759 = vmatpush1.xpose.msra.mxu0 %v724
        %760 = vmatprep.subr.mxu0 0.0
        %761 = vmatpush2.xpose.msra.mxu0 0.0
        %762 = vmatprep.subr.mxu0 0.0
        %763 = vmatpush2.xpose.msra.mxu0 0.0
        %764 = vmatprep.subr.mxu0 0.0
        %765 = vmatpush2.xpose.msra.mxu0 0.0
        %766 = vmatprep.subr.mxu0 0.0
        %767 = vmatpush2.xpose.msra.mxu0 0.0
        %768 = vmatprep.subr.mxu0 0.0
        %769 = vmatpush2.xpose.msra.mxu0 0.0
        %770 = vmatprep.subr.mxu0 0.0
        %771 = vmatpush2.xpose.msra.mxu0 0.0
        %772 = vmatprep.subr.mxu0 0.0
        %773 = vmatpush2.xpose.msra.mxu0 0.0
        %774 = vmatprep.subr.mxu0 0.0
        %775 = vmatpush2.xpose.msra.mxu0 0.0
        %776 = vmatprep.subr.mxu0 0.0
        %777 = vmatpush2.xpose.msra.mxu0 0.0
        %778 = vmatprep.subr.mxu0 0.0
        %779 = vmatpush2.xpose.msra.mxu0 0.0
        %780 = vmatprep.subr.mxu0 0.0
        %781 = vmatpush2.xpose.msra.mxu0 0.0
        %782 = vmatprep.subr.mxu0 0.0
        %783 = vmatpush2.xpose.msra.mxu0 0.0
        %784 = vmatprep.subr.mxu0 0.0
        %785 = vmatpush2.xpose.msra.mxu0 0.0
        %786 = vmatprep.subr.mxu0 0.0
        %787 = vmatpush2.xpose.msra.mxu0 0.0
        %788 = vmatprep.subr.mxu0 0.0
        %789 = vmatpush2.xpose.msra.mxu0 0.0
        %790 = vmatprep.subr.mxu0 0.0
        %791 = vmatpush2.xpose.msra.mxu0 0.0
        %792 = vmatprep.mubr.f32.mxu0 0.0
        %793 = vmatmul.mubr.f32.gmra.mxu0 %v722
        %v794 = vpop.f32.mrf.mxu0
        %v795 = vadd.f32 %v368, %v794
        %v796 = vpop.f32.mrf.mxu0
        %797 = vdwg.mxu0
        %v798 = vsel %vm622, %v795, -inf
        %799 = vmax.xlane.f32.xlu0 %v798
        %v800 = vpop.xlane.xlu0 %799
        %v801 = vsub.f32 %v795, %v800
        %v802 = vmul.f32 %v801, 1.442695
        %v803 = vpow.pop %v802
        %v804 = vsel %vm622, %v803, 0.0
        %805 = vadd.xlane.f32.xlu0 %v804
        %v806 = vpop.xlane.xlu0 %805
        %v807 = vrcp.pop %v806
        %v808 = vmul.f32 %v803, %v807
        %809 = vrot.lane.b32.xlu0 %v534, 88
        %v810 = vpop.permute.xlu0 %809
        %811 = vrot.lane.b32.xlu0 %v539, 88
        %v812 = vpop.permute.xlu0 %811
        %v815 = vsel %vm622, %v808, 0
        %v817 = vsel %vm642, %v812, 0
        %819 = vmatprep.subr.mxu0 0.0
        %820 = vmatpush1.msra.mxu0 0.0
        %821 = vmatprep.subr.mxu0 0.0
        %822 = vmatpush1.msra.mxu0 0.0
        %823 = vmatprep.subr.mxu0 0.0
        %824 = vmatpush1.msra.mxu0 0.0
        %825 = vmatprep.subr.mxu0 0.0
        %826 = vmatpush1.msra.mxu0 0.0
        %827 = vmatprep.subr.mxu0 0.0
        %828 = vmatpush1.msra.mxu0 0.0
        %829 = vmatprep.subr.mxu0 0.0
        %830 = vmatpush1.msra.mxu0 0.0
        %831 = vmatprep.subr.mxu0 0.0
        %832 = vmatpush1.msra.mxu0 0.0
        %833 = vmatprep.subr.mxu0 0.0
        %834 = vmatpush1.msra.mxu0 0.0
        %835 = vmatprep.subr.mxu0 0.0
        %836 = vmatpush1.msra.mxu0 0.0
        %837 = vmatprep.subr.mxu0 0.0
        %838 = vmatpush1.msra.mxu0 0.0
        %839 = vmatprep.subr.mxu0 0.0
        %840 = vmatpush1.msra.mxu0 0.0
        %841 = vmatprep.subr.mxu0 0.0
        %842 = vmatpush1.msra.mxu0 0.0
        %843 = vmatprep.subr.mxu0 0.0
        %844 = vmatpush1.msra.mxu0 0.0
        %845 = vmatprep.subr.mxu0 0.0
        %846 = vmatpush1.msra.mxu0 0.0
        %847 = vmatprep.subr.mxu0 0.0
        %848 = vmatpush1.msra.mxu0 %v817
        %849 = vmatprep.subr.mxu0 0.0
        %850 = vmatpush1.msra.mxu0 %v810
        %851 = vmatprep.subr.mxu0 0.0
        %852 = vmatpush2.msra.mxu0 0.0
        %853 = vmatprep.subr.mxu0 0.0
        %854 = vmatpush2.msra.mxu0 0.0
        %855 = vmatprep.subr.mxu0 0.0
        %856 = vmatpush2.msra.mxu0 0.0
        %857 = vmatprep.subr.mxu0 0.0
        %858 = vmatpush2.msra.mxu0 0.0
        %859 = vmatprep.subr.mxu0 0.0
        %860 = vmatpush2.msra.mxu0 0.0
        %861 = vmatprep.subr.mxu0 0.0
        %862 = vmatpush2.msra.mxu0 0.0
        %863 = vmatprep.subr.mxu0 0.0
        %864 = vmatpush2.msra.mxu0 0.0
        %865 = vmatprep.subr.mxu0 0.0
        %866 = vmatpush2.msra.mxu0 0.0
        %867 = vmatprep.subr.mxu0 0.0
        %868 = vmatpush2.msra.mxu0 0.0
        %869 = vmatprep.subr.mxu0 0.0
        %870 = vmatpush2.msra.mxu0 0.0
        %871 = vmatprep.subr.mxu0 0.0
        %872 = vmatpush2.msra.mxu0 0.0
        %873 = vmatprep.subr.mxu0 0.0
        %874 = vmatpush2.msra.mxu0 0.0
        %875 = vmatprep.subr.mxu0 0.0
        %876 = vmatpush2.msra.mxu0 0.0
        %877 = vmatprep.subr.mxu0 0.0
        %878 = vmatpush2.msra.mxu0 0.0
        %879 = vmatprep.subr.mxu0 0.0
        %880 = vmatpush2.msra.mxu0 0.0
        %881 = vmatprep.subr.mxu0 0.0
        %882 = vmatpush2.msra.mxu0 0.0
        %883 = vmatprep.mubr.f32.mxu0 0.0
        %884 = vmatmul.mubr.f32.gmra.mxu0 %v815
        %v885 = vpop.f32.mrf.mxu0
        %v886 = vadd.f32 0.0, %v885
        %v887 = vpop.f32.mrf.mxu0
        %888 = vdwg.mxu0
        %890 = vrot.lane.b32.xlu0 %v886, 8
        %v891 = vpop.permute.xlu0 %890
        %vm893 = vcmask 130112
        %894 = vst.msk [vmem:[#allocation2] sm:$0xff] %vm893, %v891
        %895 = vrot.lane.b32.xlu0 %v449, 112
        %v896 = vpop.permute.xlu0 %895
        %897 = vrot.lane.b32.xlu0 %v534, 112
        %v898 = vpop.permute.xlu0 %897
        %899 = vrot.lane.b32.xlu0 %v539, 112
        %v900 = vpop.permute.xlu0 %899
        %v901 = vsel %vm542, %v896, 0
        %v903 = vsel %vm542, %v898, 0
        %v905 = vsel %vm542, %v900, 0
        %907 = vmatprep.subr.mxu0 0.0
        %908 = vmatpush1.xpose.msra.mxu0 0.0
        %909 = vmatprep.subr.mxu0 0.0
        %910 = vmatpush1.xpose.msra.mxu0 0.0
        %911 = vmatprep.subr.mxu0 0.0
        %912 = vmatpush1.xpose.msra.mxu0 0.0
        %913 = vmatprep.subr.mxu0 0.0
        %914 = vmatpush1.xpose.msra.mxu0 0.0
        %915 = vmatprep.subr.mxu0 0.0
        %916 = vmatpush1.xpose.msra.mxu0 0.0
        %917 = vmatprep.subr.mxu0 0.0
        %918 = vmatpush1.xpose.msra.mxu0 0.0
        %919 = vmatprep.subr.mxu0 0.0
        %920 = vmatpush1.xpose.msra.mxu0 0.0
        %921 = vmatprep.subr.mxu0 0.0
        %922 = vmatpush1.xpose.msra.mxu0 0.0
        %923 = vmatprep.subr.mxu0 0.0
        %924 = vmatpush1.xpose.msra.mxu0 0.0
        %925 = vmatprep.subr.mxu0 0.0
        %926 = vmatpush1.xpose.msra.mxu0 0.0
        %927 = vmatprep.subr.mxu0 0.0
        %928 = vmatpush1.xpose.msra.mxu0 0.0
        %929 = vmatprep.subr.mxu0 0.0
        %930 = vmatpush1.xpose.msra.mxu0 0.0
        %931 = vmatprep.subr.mxu0 0.0
        %932 = vmatpush1.xpose.msra.mxu0 0.0
        %933 = vmatprep.subr.mxu0 0.0
        %934 = vmatpush1.xpose.msra.mxu0 0.0
        %935 = vmatprep.subr.mxu0 0.0
        %936 = vmatpush1.xpose.msra.mxu0 %v905
        %937 = vmatprep.subr.mxu0 0.0
        %938 = vmatpush1.xpose.msra.mxu0 %v903
        %939 = vmatprep.subr.mxu0 0.0
        %940 = vmatpush2.xpose.msra.mxu0 0.0
        %941 = vmatprep.subr.mxu0 0.0
        %942 = vmatpush2.xpose.msra.mxu0 0.0
        %943 = vmatprep.subr.mxu0 0.0
        %944 = vmatpush2.xpose.msra.mxu0 0.0
        %945 = vmatprep.subr.mxu0 0.0
        %946 = vmatpush2.xpose.msra.mxu0 0.0
        %947 = vmatprep.subr.mxu0 0.0
        %948 = vmatpush2.xpose.msra.mxu0 0.0
        %949 = vmatprep.subr.mxu0 0.0
        %950 = vmatpush2.xpose.msra.mxu0 0.0
        %951 = vmatprep.subr.mxu0 0.0
        %952 = vmatpush2.xpose.msra.mxu0 0.0
        %953 = vmatprep.subr.mxu0 0.0
        %954 = vmatpush2.xpose.msra.mxu0 0.0
        %955 = vmatprep.subr.mxu0 0.0
        %956 = vmatpush2.xpose.msra.mxu0 0.0
        %957 = vmatprep.subr.mxu0 0.0
        %958 = vmatpush2.xpose.msra.mxu0 0.0
        %959 = vmatprep.subr.mxu0 0.0
        %960 = vmatpush2.xpose.msra.mxu0 0.0
        %961 = vmatprep.subr.mxu0 0.0
        %962 = vmatpush2.xpose.msra.mxu0 0.0
        %963 = vmatprep.subr.mxu0 0.0
        %964 = vmatpush2.xpose.msra.mxu0 0.0
        %965 = vmatprep.subr.mxu0 0.0
        %966 = vmatpush2.xpose.msra.mxu0 0.0
        %967 = vmatprep.subr.mxu0 0.0
        %968 = vmatpush2.xpose.msra.mxu0 0.0
        %969 = vmatprep.subr.mxu0 0.0
        %970 = vmatpush2.xpose.msra.mxu0 0.0
        %971 = vmatprep.mubr.f32.mxu0 0.0
        %972 = vmatmul.mubr.f32.gmra.mxu0 %v901
        %v973 = vpop.f32.mrf.mxu0
        %v974 = vadd.f32 %v368, %v973
        %v975 = vpop.f32.mrf.mxu0
        %976 = vdwg.mxu0
        %v977 = vsel %vm622, %v974, -inf
        %978 = vmax.xlane.f32.xlu0 %v977
        %v979 = vpop.xlane.xlu0 %978
        %v980 = vsub.f32 %v974, %v979
        %v981 = vmul.f32 %v980, 1.442695
        %v982 = vpow.pop %v981
        %v983 = vsel %vm622, %v982, 0.0
        %984 = vadd.xlane.f32.xlu0 %v983
        %v985 = vpop.xlane.xlu0 %984
        %v986 = vrcp.pop %v985
        %v987 = vmul.f32 %v982, %v986
        %988 = vrot.lane.b32.xlu0 %v534, 80
        %v989 = vpop.permute.xlu0 %988
        %990 = vrot.lane.b32.xlu0 %v539, 80
        %v991 = vpop.permute.xlu0 %990
        %v994 = vsel %vm622, %v987, 0
        %v996 = vsel %vm642, %v991, 0
        %998 = vmatprep.subr.mxu0 0.0
        %999 = vmatpush1.msra.mxu0 0.0
        %1000 = vmatprep.subr.mxu0 0.0
        %1001 = vmatpush1.msra.mxu0 0.0
        %1002 = vmatprep.subr.mxu0 0.0
        %1003 = vmatpush1.msra.mxu0 0.0
        %1004 = vmatprep.subr.mxu0 0.0
        %1005 = vmatpush1.msra.mxu0 0.0
        %1006 = vmatprep.subr.mxu0 0.0
        %1007 = vmatpush1.msra.mxu0 0.0
        %1008 = vmatprep.subr.mxu0 0.0
        %1009 = vmatpush1.msra.mxu0 0.0
        %1010 = vmatprep.subr.mxu0 0.0
        %1011 = vmatpush1.msra.mxu0 0.0
        %1012 = vmatprep.subr.mxu0 0.0
        %1013 = vmatpush1.msra.mxu0 0.0
        %1014 = vmatprep.subr.mxu0 0.0
        %1015 = vmatpush1.msra.mxu0 0.0
        %1016 = vmatprep.subr.mxu0 0.0
        %1017 = vmatpush1.msra.mxu0 0.0
        %1018 = vmatprep.subr.mxu0 0.0
        %1019 = vmatpush1.msra.mxu0 0.0
        %1020 = vmatprep.subr.mxu0 0.0
        %1021 = vmatpush1.msra.mxu0 0.0
        %1022 = vmatprep.subr.mxu0 0.0
        %1023 = vmatpush1.msra.mxu0 0.0
        %1024 = vmatprep.subr.mxu0 0.0
        %1025 = vmatpush1.msra.mxu0 0.0
        %1026 = vmatprep.subr.mxu0 0.0
        %1027 = vmatpush1.msra.mxu0 %v996
        %1028 = vmatprep.subr.mxu0 0.0
        %1029 = vmatpush1.msra.mxu0 %v989
        %1030 = vmatprep.subr.mxu0 0.0
        %1031 = vmatpush2.msra.mxu0 0.0
        %1032 = vmatprep.subr.mxu0 0.0
        %1033 = vmatpush2.msra.mxu0 0.0
        %1034 = vmatprep.subr.mxu0 0.0
        %1035 = vmatpush2.msra.mxu0 0.0
        %1036 = vmatprep.subr.mxu0 0.0
        %1037 = vmatpush2.msra.mxu0 0.0
        %1038 = vmatprep.subr.mxu0 0.0
        %1039 = vmatpush2.msra.mxu0 0.0
        %1040 = vmatprep.subr.mxu0 0.0
        %1041 = vmatpush2.msra.mxu0 0.0
        %1042 = vmatprep.subr.mxu0 0.0
        %1043 = vmatpush2.msra.mxu0 0.0
        %1044 = vmatprep.subr.mxu0 0.0
        %1045 = vmatpush2.msra.mxu0 0.0
        %1046 = vmatprep.subr.mxu0 0.0
        %1047 = vmatpush2.msra.mxu0 0.0
        %1048 = vmatprep.subr.mxu0 0.0
        %1049 = vmatpush2.msra.mxu0 0.0
        %1050 = vmatprep.subr.mxu0 0.0
        %1051 = vmatpush2.msra.mxu0 0.0
        %1052 = vmatprep.subr.mxu0 0.0
        %1053 = vmatpush2.msra.mxu0 0.0
        %1054 = vmatprep.subr.mxu0 0.0
        %1055 = vmatpush2.msra.mxu0 0.0
        %1056 = vmatprep.subr.mxu0 0.0
        %1057 = vmatpush2.msra.mxu0 0.0
        %1058 = vmatprep.subr.mxu0 0.0
        %1059 = vmatpush2.msra.mxu0 0.0
        %1060 = vmatprep.subr.mxu0 0.0
        %1061 = vmatpush2.msra.mxu0 0.0
        %1062 = vmatprep.mubr.f32.mxu0 0.0
        %1063 = vmatmul.mubr.f32.gmra.mxu0 %v994
        %v1064 = vpop.f32.mrf.mxu0
        %v1065 = vadd.f32 0.0, %v1064
        %v1066 = vpop.f32.mrf.mxu0
        %1067 = vdwg.mxu0
        %1069 = vrot.lane.b32.xlu0 %v1065, 16
        %v1070 = vpop.permute.xlu0 %1069
        %vm1072 = vcmask 195712
        %1073 = vst.msk [vmem:[#allocation2] sm:$0xff] %vm1072, %v1070
        %1074 = vrot.lane.b32.xlu0 %v449, 104
        %v1075 = vpop.permute.xlu0 %1074
        %1076 = vrot.lane.b32.xlu0 %v534, 104
        %v1077 = vpop.permute.xlu0 %1076
        %1078 = vrot.lane.b32.xlu0 %v539, 104
        %v1079 = vpop.permute.xlu0 %1078
        %v1080 = vsel %vm542, %v1075, 0
        %v1082 = vsel %vm542, %v1077, 0
        %v1084 = vsel %vm542, %v1079, 0
        %1086 = vmatprep.subr.mxu0 0.0
        %1087 = vmatpush1.xpose.msra.mxu0 0.0
        %1088 = vmatprep.subr.mxu0 0.0
        %1089 = vmatpush1.xpose.msra.mxu0 0.0
        %1090 = vmatprep.subr.mxu0 0.0
        %1091 = vmatpush1.xpose.msra.mxu0 0.0
        %1092 = vmatprep.subr.mxu0 0.0
        %1093 = vmatpush1.xpose.msra.mxu0 0.0
        %1094 = vmatprep.subr.mxu0 0.0
        %1095 = vmatpush1.xpose.msra.mxu0 0.0
        %1096 = vmatprep.subr.mxu0 0.0
        %1097 = vmatpush1.xpose.msra.mxu0 0.0
        %1098 = vmatprep.subr.mxu0 0.0
        %1099 = vmatpush1.xpose.msra.mxu0 0.0
        %1100 = vmatprep.subr.mxu0 0.0
        %1101 = vmatpush1.xpose.msra.mxu0 0.0
        %1102 = vmatprep.subr.mxu0 0.0
        %1103 = vmatpush1.xpose.msra.mxu0 0.0
        %1104 = vmatprep.subr.mxu0 0.0
        %1105 = vmatpush1.xpose.msra.mxu0 0.0
        %1106 = vmatprep.subr.mxu0 0.0
        %1107 = vmatpush1.xpose.msra.mxu0 0.0
        %1108 = vmatprep.subr.mxu0 0.0
        %1109 = vmatpush1.xpose.msra.mxu0 0.0
        %1110 = vmatprep.subr.mxu0 0.0
        %1111 = vmatpush1.xpose.msra.mxu0 0.0
        %1112 = vmatprep.subr.mxu0 0.0
        %1113 = vmatpush1.xpose.msra.mxu0 0.0
        %1114 = vmatprep.subr.mxu0 0.0
        %1115 = vmatpush1.xpose.msra.mxu0 %v1084
        %1116 = vmatprep.subr.mxu0 0.0
        %1117 = vmatpush1.xpose.msra.mxu0 %v1082
        %1118 = vmatprep.subr.mxu0 0.0
        %1119 = vmatpush2.xpose.msra.mxu0 0.0
        %1120 = vmatprep.subr.mxu0 0.0
        %1121 = vmatpush2.xpose.msra.mxu0 0.0
        %1122 = vmatprep.subr.mxu0 0.0
        %1123 = vmatpush2.xpose.msra.mxu0 0.0
        %1124 = vmatprep.subr.mxu0 0.0
        %1125 = vmatpush2.xpose.msra.mxu0 0.0
        %1126 = vmatprep.subr.mxu0 0.0
        %1127 = vmatpush2.xpose.msra.mxu0 0.0
        %1128 = vmatprep.subr.mxu0 0.0
        %1129 = vmatpush2.xpose.msra.mxu0 0.0
        %1130 = vmatprep.subr.mxu0 0.0
        %1131 = vmatpush2.xpose.msra.mxu0 0.0
        %1132 = vmatprep.subr.mxu0 0.0
        %1133 = vmatpush2.xpose.msra.mxu0 0.0
        %1134 = vmatprep.subr.mxu0 0.0
        %1135 = vmatpush2.xpose.msra.mxu0 0.0
        %1136 = vmatprep.subr.mxu0 0.0
        %1137 = vmatpush2.xpose.msra.mxu0 0.0
        %1138 = vmatprep.subr.mxu0 0.0
        %1139 = vmatpush2.xpose.msra.mxu0 0.0
        %1140 = vmatprep.subr.mxu0 0.0
        %1141 = vmatpush2.xpose.msra.mxu0 0.0
        %1142 = vmatprep.subr.mxu0 0.0
        %1143 = vmatpush2.xpose.msra.mxu0 0.0
        %1144 = vmatprep.subr.mxu0 0.0
        %1145 = vmatpush2.xpose.msra.mxu0 0.0
        %1146 = vmatprep.subr.mxu0 0.0
        %1147 = vmatpush2.xpose.msra.mxu0 0.0
        %1148 = vmatprep.subr.mxu0 0.0
        %1149 = vmatpush2.xpose.msra.mxu0 0.0
        %1150 = vmatprep.mubr.f32.mxu0 0.0
        %1151 = vmatmul.mubr.f32.gmra.mxu0 %v1080
        %v1152 = vpop.f32.mrf.mxu0
        %v1153 = vadd.f32 %v368, %v1152
        %v1154 = vpop.f32.mrf.mxu0
        %1155 = vdwg.mxu0
        %v1156 = vsel %vm622, %v1153, -inf
        %1157 = vmax.xlane.f32.xlu0 %v1156
        %v1158 = vpop.xlane.xlu0 %1157
        %v1159 = vsub.f32 %v1153, %v1158
        %v1160 = vmul.f32 %v1159, 1.442695
        %v1161 = vpow.pop %v1160
        %v1162 = vsel %vm622, %v1161, 0.0
        %1163 = vadd.xlane.f32.xlu0 %v1162
        %v1164 = vpop.xlane.xlu0 %1163
        %v1165 = vrcp.pop %v1164
        %v1166 = vmul.f32 %v1161, %v1165
        %1167 = vrot.lane.b32.xlu0 %v534, 72
        %v1168 = vpop.permute.xlu0 %1167
        %1169 = vrot.lane.b32.xlu0 %v539, 72
        %v1170 = vpop.permute.xlu0 %1169
        %v1173 = vsel %vm622, %v1166, 0
        %v1175 = vsel %vm642, %v1170, 0
        %1177 = vmatprep.subr.mxu0 0.0
        %1178 = vmatpush1.msra.mxu0 0.0
        %1179 = vmatprep.subr.mxu0 0.0
        %1180 = vmatpush1.msra.mxu0 0.0
        %1181 = vmatprep.subr.mxu0 0.0
        %1182 = vmatpush1.msra.mxu0 0.0
        %1183 = vmatprep.subr.mxu0 0.0
        %1184 = vmatpush1.msra.mxu0 0.0
        %1185 = vmatprep.subr.mxu0 0.0
        %1186 = vmatpush1.msra.mxu0 0.0
        %1187 = vmatprep.subr.mxu0 0.0
        %1188 = vmatpush1.msra.mxu0 0.0
        %1189 = vmatprep.subr.mxu0 0.0
        %1190 = vmatpush1.msra.mxu0 0.0
        %1191 = vmatprep.subr.mxu0 0.0
        %1192 = vmatpush1.msra.mxu0 0.0
        %1193 = vmatprep.subr.mxu0 0.0
        %1194 = vmatpush1.msra.mxu0 0.0
        %1195 = vmatprep.subr.mxu0 0.0
        %1196 = vmatpush1.msra.mxu0 0.0
        %1197 = vmatprep.subr.mxu0 0.0
        %1198 = vmatpush1.msra.mxu0 0.0
        %1199 = vmatprep.subr.mxu0 0.0
        %1200 = vmatpush1.msra.mxu0 0.0
        %1201 = vmatprep.subr.mxu0 0.0
        %1202 = vmatpush1.msra.mxu0 0.0
        %1203 = vmatprep.subr.mxu0 0.0
        %1204 = vmatpush1.msra.mxu0 0.0
        %1205 = vmatprep.subr.mxu0 0.0
        %1206 = vmatpush1.msra.mxu0 %v1175
        %1207 = vmatprep.subr.mxu0 0.0
        %1208 = vmatpush1.msra.mxu0 %v1168
        %1209 = vmatprep.subr.mxu0 0.0
        %1210 = vmatpush2.msra.mxu0 0.0
        %1211 = vmatprep.subr.mxu0 0.0
        %1212 = vmatpush2.msra.mxu0 0.0
        %1213 = vmatprep.subr.mxu0 0.0
        %1214 = vmatpush2.msra.mxu0 0.0
        %1215 = vmatprep.subr.mxu0 0.0
        %1216 = vmatpush2.msra.mxu0 0.0
        %1217 = vmatprep.subr.mxu0 0.0
        %1218 = vmatpush2.msra.mxu0 0.0
        %1219 = vmatprep.subr.mxu0 0.0
        %1220 = vmatpush2.msra.mxu0 0.0
        %1221 = vmatprep.subr.mxu0 0.0
        %1222 = vmatpush2.msra.mxu0 0.0
        %1223 = vmatprep.subr.mxu0 0.0
        %1224 = vmatpush2.msra.mxu0 0.0
        %1225 = vmatprep.subr.mxu0 0.0
        %1226 = vmatpush2.msra.mxu0 0.0
        %1227 = vmatprep.subr.mxu0 0.0
        %1228 = vmatpush2.msra.mxu0 0.0
        %1229 = vmatprep.subr.mxu0 0.0
        %1230 = vmatpush2.msra.mxu0 0.0
        %1231 = vmatprep.subr.mxu0 0.0
        %1232 = vmatpush2.msra.mxu0 0.0
        %1233 = vmatprep.subr.mxu0 0.0
        %1234 = vmatpush2.msra.mxu0 0.0
        %1235 = vmatprep.subr.mxu0 0.0
        %1236 = vmatpush2.msra.mxu0 0.0
        %1237 = vmatprep.subr.mxu0 0.0
        %1238 = vmatpush2.msra.mxu0 0.0
        %1239 = vmatprep.subr.mxu0 0.0
        %1240 = vmatpush2.msra.mxu0 0.0
        %1241 = vmatprep.mubr.f32.mxu0 0.0
        %1242 = vmatmul.mubr.f32.gmra.mxu0 %v1173
        %v1243 = vpop.f32.mrf.mxu0
        %v1244 = vadd.f32 0.0, %v1243
        %v1245 = vpop.f32.mrf.mxu0
        %1246 = vdwg.mxu0
        %1248 = vrot.lane.b32.xlu0 %v1244, 24
        %v1249 = vpop.permute.xlu0 %1248
        %vm1251 = vcmask 261312
        %1252 = vst.msk [vmem:[#allocation2] sm:$0xff] %vm1251, %v1249
        %v1253 = vld [vmem:[#allocation2] sm:$0xff]
        %v1254 = vld [vmem:[%s7] sm:$0xff]
        %v1255 = vld [vmem:[%s7 + $0x8] sm:$0xff]
        %v1256 = vld [vmem:[%s7 + $0x10] sm:$0xff]
        %v1257 = vld [vmem:[%s7 + $0x18] sm:$0xff]
        %v1258 = vld [vmem:[%s8] sm:$0x1]
        %v1260 = vlaneseq
        %v1261 = vshrl.u32 %v1260, 7
        %v1262 = vsub.s32 0, %v1261
        %v1263 = vrot.slane %v1258, %v1262
        %vm1265 = vcmask 261120
        %v1267 = vsel %vm1265, %v1253, 0
        %1269 = vmatprep.subr.mxu0 0.0
        %1270 = vmatpush1.msra.mxu0 0.0
        %1271 = vmatprep.subr.mxu0 0.0
        %1272 = vmatpush1.msra.mxu0 0.0
        %1273 = vmatprep.subr.mxu0 0.0
        %1274 = vmatpush1.msra.mxu0 0.0
        %1275 = vmatprep.subr.mxu0 0.0
        %1276 = vmatpush1.msra.mxu0 0.0
        %1277 = vmatprep.subr.mxu0 0.0
        %1278 = vmatpush1.msra.mxu0 0.0
        %1279 = vmatprep.subr.mxu0 0.0
        %1280 = vmatpush1.msra.mxu0 0.0
        %1281 = vmatprep.subr.mxu0 0.0
        %1282 = vmatpush1.msra.mxu0 0.0
        %1283 = vmatprep.subr.mxu0 0.0
        %1284 = vmatpush1.msra.mxu0 0.0
        %1285 = vmatprep.subr.mxu0 0.0
        %1286 = vmatpush1.msra.mxu0 0.0
        %1287 = vmatprep.subr.mxu0 0.0
        %1288 = vmatpush1.msra.mxu0 0.0
        %1289 = vmatprep.subr.mxu0 0.0
        %1290 = vmatpush1.msra.mxu0 0.0
        %1291 = vmatprep.subr.mxu0 0.0
        %1292 = vmatpush1.msra.mxu0 0.0
        %1293 = vmatprep.subr.mxu0 0.0
        %1294 = vmatpush1.msra.mxu0 %v1257
        %1295 = vmatprep.subr.mxu0 0.0
        %1296 = vmatpush1.msra.mxu0 %v1256
        %1297 = vmatprep.subr.mxu0 0.0
        %1298 = vmatpush1.msra.mxu0 %v1255
        %1299 = vmatprep.subr.mxu0 0.0
        %1300 = vmatpush1.msra.mxu0 %v1254
        %1301 = vmatprep.subr.mxu0 0.0
        %1302 = vmatpush2.msra.mxu0 0.0
        %1303 = vmatprep.subr.mxu0 0.0
        %1304 = vmatpush2.msra.mxu0 0.0
        %1305 = vmatprep.subr.mxu0 0.0
        %1306 = vmatpush2.msra.mxu0 0.0
        %1307 = vmatprep.subr.mxu0 0.0
        %1308 = vmatpush2.msra.mxu0 0.0
        %1309 = vmatprep.subr.mxu0 0.0
        %1310 = vmatpush2.msra.mxu0 0.0
        %1311 = vmatprep.subr.mxu0 0.0
        %1312 = vmatpush2.msra.mxu0 0.0
        %1313 = vmatprep.subr.mxu0 0.0
        %1314 = vmatpush2.msra.mxu0 0.0
        %1315 = vmatprep.subr.mxu0 0.0
        %1316 = vmatpush2.msra.mxu0 0.0
        %1317 = vmatprep.subr.mxu0 0.0
        %1318 = vmatpush2.msra.mxu0 0.0
        %1319 = vmatprep.subr.mxu0 0.0
        %1320 = vmatpush2.msra.mxu0 0.0
        %1321 = vmatprep.subr.mxu0 0.0
        %1322 = vmatpush2.msra.mxu0 0.0
        %1323 = vmatprep.subr.mxu0 0.0
        %1324 = vmatpush2.msra.mxu0 0.0
        %1325 = vmatprep.subr.mxu0 0.0
        %1326 = vmatpush2.msra.mxu0 0.0
        %1327 = vmatprep.subr.mxu0 0.0
        %1328 = vmatpush2.msra.mxu0 0.0
        %1329 = vmatprep.subr.mxu0 0.0
        %1330 = vmatpush2.msra.mxu0 0.0
        %1331 = vmatprep.subr.mxu0 0.0
        %1332 = vmatpush2.msra.mxu0 0.0
        %1333 = vmatprep.mubr.f32.mxu0 0.0
        %1334 = vmatmul.mubr.f32.gmra.mxu0 %v1267
        %v1335 = vpop.f32.mrf.mxu0
        %v1336 = vadd.f32 %v1263, %v1335
        %v1337 = vpop.f32.mrf.mxu0
        %1338 = vdwg.mxu0
        %1339 = vst.msk [vmem:[%s351] sm:$0xff] %vm378, %v1336
        %s1340 = sand.u32 %s235, 1
        %s1341 = scalar_lea.sflag [#allocation4], %s1340
        %s1342 = sand.u32 %s235, 1
        %s1343 = smul.addr %s1342, 8
        %s1344 = scalar_lea.vmem [#allocation3], %s1343
        // Predicated region
        $region57: #{tpu_custom_call.1} parent=55 // pred_check
          %p1345 = pneg %p245
        $region58: #{tpu_custom_call.1} parent=55 // pred_check_branch
          %1347 = sbr.rel (%p1345) target = $region60
        $region59: #{tpu_custom_call.1} parent=55 // pred_region
          %s1349 = ssub.s32 128, 128
          %1350 = vsyncadd %s1341, %s1349
          %s1351 = smul.addr %s23, 128
          %s1352 = scalar_lea.hbm %s9, %s1351
          %s1354 = sshll.u32 %s1344, 4
          %s1355 = int_to_ptr.vmem [resolvable:$true] %s1354
          %1357 = dma.vmem_to_hbm [thread:$0]  %s1355, 128, %s1352, %s1341
        $region60: #{tpu_custom_call.1} parent=55 // pred_fallthru
          _
      $region56: #{tpu_custom_call.1} parent=5 // pred_fallthru
        _
      %p1358 = scmp.le.s32.totalorder 2, %s18
      // Predicated region
      $region61: #{tpu_custom_call.1} parent=5 // pred_check
        %p1359 = pneg %p1358
      $region62: #{tpu_custom_call.1} parent=5 // pred_check_branch
        %1361 = sbr.rel (%p1359) target = $region64
      $region63: #{tpu_custom_call.1} parent=5 // pred_region
        %s1362 = ssub.s32 %s18, 2
        // Predicated region
        $region65: #{tpu_custom_call.1} parent=63 // pred_check
          %p1363 = pneg %p251
        $region66: #{tpu_custom_call.1} parent=63 // pred_check_branch
          %1365 = sbr.rel (%p1363) target = $region68
        $region67: #{tpu_custom_call.1} parent=63 // pred_region
          %s1366 = sand.u32 %s236, 1
          %s1367 = scalar_lea.sflag [#allocation4], %s1366
          %s1368 = sand.u32 %s236, 1
          %s1369 = smul.addr %s1368, 8
          %s1370 = scalar_lea.vmem [#allocation3], %s1369
          %1371 = dma.done %s1367, 128
        $region68: #{tpu_custom_call.1} parent=63 // pred_fallthru
          _
      $region64: #{tpu_custom_call.1} parent=5 // pred_fallthru
        _
    $region6: #{tpu_custom_call.1} parent=1 // loop_footer
      %s22 = sadd.s32 1, %s18
    $region7: #{tpu_custom_call.1} parent=1 // loop_footer_branch
      %17 = sbr.rel target = $region3
    $region8: #{tpu_custom_call.1} parent=1 // loop_exit
      _
    %1372 = vsyncpa [#allocation4], 1
    %s1373 = scalar_lea.sflag [#allocation4], 1
    %1374 = vsyncpa %s1373, 1

</llo_original>
